<compile_context>
chip_gen: v7x
topology: tpu7x:2x2x1
jax: 0.10.0
libtpu: 0.0.40
codegen_flags: <defaults>
</compile_context>

<pallas_src>
from functools import partial

import jax
import jax.numpy as jnp
from jax.experimental import pallas as pl
from jax.experimental.pallas import tpu as pltpu


# ----------------------------------------------------------------------------
# VGG19 "features" architecture (torchvision layer indexing).
# ----------------------------------------------------------------------------
_VGG19_CFG = [64, 64, 'M', 128, 128, 'M', 256, 256, 256, 256, 'M',
              512, 512, 512, 512, 'M', 512, 512, 512, 512, 'M']

_VMEM_LIMIT = 48 * 1024 * 1024      # safe on v5e/v6e (128 MiB) and v7x (64 MiB physical)
_PATCH_BUDGET = 6 * 1024 * 1024     # target bytes for the in-VMEM (HW_tile, 9*Cin) patch
_ELTWISE_BUDGET = 2 * 1024 * 1024   # target input-block bytes for ReLU / pool tiles


def _build_vgg19_feature_cfg():
    """[('conv', cin, cout) | ('relu', None, None) | ('pool', None, None)] per layer idx."""
    layers, in_c = [], 3
    for v in _VGG19_CFG:
        if v == 'M':
            layers.append(('pool', None, None))
        else:
            layers.append(('conv', in_c, v))
            layers.append(('relu', None, None))
            in_c = v
    return layers


def _largest_divisor_leq(n, cap):
    cap = int(max(1, min(n, cap)))
    for d in range(cap, 0, -1):
        if n % d == 0:
            return d
    return 1


# ----------------------------------------------------------------------------
# Pallas kernels
# ----------------------------------------------------------------------------
def _conv3x3_kernel(x_ref, w_ref, b_ref, o_ref, *, apply_relu, compute_dtype):
    # x_ref: (tile_h+2, W+2, Cin)  padded row window with a 2-row / 2-col halo
    # w_ref: (9*Cin, Cout_tile)    b_ref: (1, Cout_tile)
    # o_ref: (tile_h, W, Cout_tile)
    th, wo, _ = o_ref.shape
    cin = x_ref.shape[-1]
    xb = x_ref[...].astype(compute_dtype)
    # Build the (tile_h*W, 9*Cin) patch matrix from 9 statically shifted views of
    # the VMEM block (no im2col in HBM), then issue a single fused MXU matmul.
    taps = []
    for dy in range(3):
        for dx in range(3):
            taps.append(xb[dy:dy + th, dx:dx + wo, :].reshape(th * wo, cin))
    patch = jnp.concatenate(taps, axis=-1)                        # (th*W, 9*Cin)
    acc = jnp.dot(patch, w_ref[...].astype(compute_dtype),
                  preferred_element_type=jnp.float32)             # one MXU matmul, f32 acc
    acc = acc + b_ref[...].astype(jnp.float32)                    # fused bias
    if apply_relu:                                                # fused ReLU epilogue
        acc = jnp.maximum(acc, 0.0)
    o_ref[...] = acc.reshape(th, wo, -1).astype(o_ref.dtype)


def _relu_kernel(x_ref, o_ref):
    o_ref[...] = jnp.maximum(x_ref[...], 0.0)


def _maxpool2_kernel(x_ref, o_ref):
    # x_ref: (tile_ho, 2, Wo, 2*C) == row-major reinterpretation of (2*tile_ho, 2*Wo, C)
    c = o_ref.shape[-1]
    x = x_ref[...]
    m = jnp.maximum(x[:, 0], x[:, 1])                      # max over the row pair
    o_ref[...] = jnp.maximum(m[:, :, :c], m[:, :, c:])     # max over the column pair


# ----------------------------------------------------------------------------
# Pallas wrappers (NHWC)
# ----------------------------------------------------------------------------
def conv3x3_pallas(x, w_oihw, b, *, pad_mode, apply_relu, compute_dtype=None):
    """3x3 conv, stride 1, pad 1, fused bias (+ optional fused ReLU). x is NHWC."""
    n, h, wd, cin = x.shape
    cout = w_oihw.shape[0]
    compute_dtype = compute_dtype or x.dtype
    itemsize = jnp.dtype(x.dtype).itemsize

    xp = jnp.pad(x, ((0, 0), (1, 1), (1, 1), (0, 0)), mode=pad_mode)

    # Row tile sized so the in-VMEM (tile_h*W, 9*Cin) patch stays within budget.
    tile_h = _largest_divisor_leq(h, _PATCH_BUDGET // max(9 * wd * cin * itemsize, 1))
    nt = h // tile_h
    # Overlapping row windows with a 2-row halo: tiny HBM duplication (vs the old
    # 9x im2col); XLA fuses the pad + slicing into a single copy.
    # TODO(synk): express the halo with an element-indexed BlockSpec (pl.Element)
    # to remove even this duplication.
    if nt == 1:
        xwin = xp[:, None]                                     # (n, 1, h+2, w+2, cin)
    else:
        xwin = jnp.stack(
            [xp[:, t * tile_h:t * tile_h + tile_h + 2] for t in range(nt)], axis=1)

    tile_co = min(cout, 256)                                   # Cout tiling for 512-wide layers
    nco = cout // tile_co

    # Weights as (9*Cin, Cout), tap-major / cin-minor to match the patch layout.
    wk = jnp.transpose(w_oihw, (2, 3, 1, 0)).reshape(9 * cin, cout).astype(x.dtype)
    b2 = b.reshape(1, cout).astype(jnp.float32)

    flops = int(2 * n * h * wd * 9 * cin * cout)
    bytes_accessed = int((xwin.size + wk.size + n * h * wd * cout) * itemsize + b2.size * 4)

    # TODO(synk): on v5e, K-chunk the 9*Cin contraction (K<=256) with an
    # 'arbitrary' reduction grid axis + deeper buffering for the 512-ch layers.
    out = pl.pallas_call(
        partial(_conv3x3_kernel, apply_relu=apply_relu, compute_dtype=compute_dtype),
        out_shape=jax.ShapeDtypeStruct((n, h, wd, cout), x.dtype),
        grid=(n, nt, nco),
        in_specs=[
            pl.BlockSpec((None, None, tile_h + 2, wd + 2, cin),
                         lambda ni, ti, ci: (ni, ti, 0, 0, 0)),
            pl.BlockSpec((9 * cin, tile_co), lambda ni, ti, ci: (0, ci)),
            pl.BlockSpec((1, tile_co), lambda ni, ti, ci: (0, ci)),
        ],
        out_specs=pl.BlockSpec((None, tile_h, wd, tile_co),
                               lambda ni, ti, ci: (ni, ti, 0, ci)),
        compiler_params=pltpu.CompilerParams(
            dimension_semantics=("parallel", "parallel", "parallel"),
            vmem_limit_bytes=_VMEM_LIMIT),
        cost_estimate=pl.CostEstimate(flops=flops, transcendentals=0,
                                      bytes_accessed=bytes_accessed),
    )(xwin, wk, b2)
    return out


def relu_pallas(x):
    # Only used when a conv's pre-activation output is itself requested
    # (otherwise ReLU is fused into the conv epilogue).
    n, h, w, c = x.shape
    itemsize = jnp.dtype(x.dtype).itemsize
    tile_h = _largest_divisor_leq(h, _ELTWISE_BUDGET // max(w * c * itemsize, 1))
    nt = h // tile_h
    spec = pl.BlockSpec((None, tile_h, w, c), lambda ni, ti: (ni, ti, 0, 0))
    return pl.pallas_call(
        _relu_kernel,
        out_shape=jax.ShapeDtypeStruct(x.shape, x.dtype),
        grid=(n, nt),
        in_specs=[spec],
        out_specs=spec,
        compiler_params=pltpu.CompilerParams(
            dimension_semantics=("parallel", "parallel"),
            vmem_limit_bytes=_VMEM_LIMIT),
    )(x)


def maxpool2_pallas(x):
    """2x2 max pool, stride 2 (floor mode, like nn.MaxPool2d). x is NHWC."""
    n, h, w, c = x.shape
    ho, wo = h // 2, w // 2
    if (h % 2) or (w % 2):                       # PyTorch floor truncation
        x = x[:, :2 * ho, :2 * wo, :]
    xr = x.reshape(n, ho, 2, wo, 2 * c)          # free row-major reinterpretation
    itemsize = jnp.dtype(x.dtype).itemsize
    tile_ho = _largest_divisor_leq(ho, _ELTWISE_BUDGET // max(4 * wo * c * itemsize, 1))
    nt = ho // tile_ho
    return pl.pallas_call(
        _maxpool2_kernel,
        out_shape=jax.ShapeDtypeStruct((n, ho, wo, c), x.dtype),
        grid=(n, nt),
        in_specs=[pl.BlockSpec((None, tile_ho, 2, wo, 2 * c),
                               lambda ni, ti: (ni, ti, 0, 0, 0))],
        out_specs=pl.BlockSpec((None, tile_ho, wo, c),
                               lambda ni, ti: (ni, ti, 0, 0)),
        compiler_params=pltpu.CompilerParams(
            dimension_semantics=("parallel", "parallel"),
            vmem_limit_bytes=_VMEM_LIMIT),
    )(xr)


# ----------------------------------------------------------------------------
# VGGFeatures (Pallas version)
# ----------------------------------------------------------------------------
class VGGFeaturesPallas:
    pooling_scales = {'max': 1.0, 'average': 2.0, 'l2': 0.78}

    def __init__(self, layers, pooling='max', seed=0, compute_dtype=jnp.float32):
        if pooling != 'max':
            # TODO(synk): 'average' (AvgPool2d) / 'l2' (LPPool2d) pooling + Scale wrapper.
            raise NotImplementedError("only pooling='max' is implemented")
        self.layers = sorted(set(layers))
        self.compute_dtype = compute_dtype     # jnp.bfloat16 doubles MXU/HBM throughput
        self.mean = jnp.array([0.485, 0.456, 0.406], jnp.float32)
        self.std = jnp.array([0.229, 0.224, 0.225], jnp.float32)
        self.cfg = _build_vgg19_feature_cfg()[: self.layers[-1] + 1]

        # Deterministic synthetic weights with the exact VGG19 conv shapes.
        # TODO(synk): real IMAGENET1K_V1 pretrained weights cannot be loaded here.
        key = jax.random.PRNGKey(seed)
        self.params = {}
        for i, (kind, cin, cout) in enumerate(self.cfg):
            if kind == 'conv':
                key, kw, kb = jax.random.split(key, 3)
                fan_in = cin * 9
                w = jax.random.normal(kw, (cout, cin, 3, 3), jnp.float32) * (2.0 / fan_in) ** 0.5
                b = jax.random.normal(kb, (cout,), jnp.float32) * 0.01
                self.params[i] = (w, b)

        # Fold transforms.Normalize into conv1_1 (exact: replicate padding commutes
        # with the per-pixel affine), eliminating the standalone normalize pass.
        w0, b0 = self.params[0]
        inv_std = 1.0 / self.std
        w0f = w0 * inv_std[None, :, None, None]
        b0f = b0 - jnp.sum(w0 * (self.mean * inv_std)[None, :, None, None], axis=(1, 2, 3))
        self._params0_folded = (w0f, b0f)

    @staticmethod
    def _get_min_size(layers):
        last_layer = max(layers)
        min_size = 1
        for layer in [4, 9, 18, 27, 36]:
            if last_layer < layer:
                break
            min_size *= 2
        return min_size

    def __call__(self, x, layers=None):
        # x: NCHW float32, exactly like the PyTorch module's `input`.
        layers = self.layers if layers is None else sorted(set(layers))
        h, w = x.shape[2:4]
        min_size = self._get_min_size(layers)
        if min(h, w) < min_size:
            raise ValueError(f'Input is {h}x{w} but must be at least {min_size}x{min_size}')

        last = max(layers)
        feats = {'input': x}
        cur = jnp.transpose(x, (0, 2, 3, 1))           # NCHW -> NHWC once; stays NHWC
        i = 0
        while i <= last:
            kind = self.cfg[i][0]
            if kind == 'conv':
                wi, bi = self._params0_folded if i == 0 else self.params[i]
                pad_mode = 'edge' if i == 0 else 'constant'   # layer 0: replicate padding
                # Fuse the following ReLU into the conv epilogue unless this conv's
                # own pre-activation output was requested.
                fuse_relu = (i not in layers and i + 1 <= last
                             and self.cfg[i + 1][0] == 'relu')
                cur = conv3x3_pallas(cur, wi, bi, pad_mode=pad_mode,
                                     apply_relu=fuse_relu,
                                     compute_dtype=self.compute_dtype)
                if fuse_relu:
                    i += 1                              # the ReLU layer was consumed too
            elif kind == 'relu':
                cur = relu_pallas(cur)
            else:                                       # 2x2 max pool, stride 2
                cur = maxpool2_pallas(cur)
            if i in layers:
                feats[i] = jnp.transpose(cur, (0, 3, 1, 2))   # NCHW only for returned maps
            i += 1
        return feats


# ----------------------------------------------------------------------------
# Pure-JAX reference for validation (unfused: normalize -> conv -> relu -> pool)
# ----------------------------------------------------------------------------
def _ref_forward(model, x, layers):
    layers = sorted(set(layers))
    mean = model.mean.reshape(1, 3, 1, 1)
    std = model.std.reshape(1, 3, 1, 1)
    feats = {'input': x}
    h = (x - mean) / std
    for i in range(max(layers) + 1):
        kind = model.cfg[i][0]
        if kind == 'conv':
            wi, bi = model.params[i]
            mode = 'edge' if i == 0 else 'constant'
            hp = jnp.pad(h, ((0, 0), (0, 0), (1, 1), (1, 1)), mode=mode)
            h = jax.lax.conv_general_dilated(
                hp, wi, (1, 1), 'VALID',
                dimension_numbers=('NCHW', 'OIHW', 'NCHW')) + bi.reshape(1, -1, 1, 1)
        elif kind == 'relu':
            h = jnp.maximum(h, 0.0)
        else:
            n, c, hh, ww = h.shape
            h = h.reshape(n, c, hh // 2, 2, ww // 2, 2).max(axis=(3, 5))
        if i in layers:
            feats[i] = h
    return feats


# ----------------------------------------------------------------------------
# Main
# ----------------------------------------------------------------------------
if __name__ == "__main__":
    key = jax.random.PRNGKey(0)
    x = jax.random.uniform(key, (2, 3, 16, 16), jnp.float32)    # NCHW, like PyTorch

    # layers [1, 4, 6] -> relu1_1, pool1, relu2_1 (VGG19 feature indices)
    model = VGGFeaturesPallas(layers=[1, 4, 6])
    feats = model(x)
    # feats mixes str ('input') and int keys, so it is not a sortable pytree:
    # block on the leaf values instead of the dict itself.
    jax.block_until_ready(list(feats.values()))

    ref = _ref_forward(model, x, [1, 4, 6])
    for k in (1, 4, 6):
        assert feats[k].shape == ref[k].shape, (k, feats[k].shape, ref[k].shape)
        assert jnp.allclose(feats[k], ref[k], rtol=1e-3, atol=1e-3), f"mismatch at layer {k}"
    assert jnp.array_equal(feats['input'], x)

    print("KERNEL_OK")
</pallas_src>

<mosaic_0001>
module attributes {stable_mosaic.version = 11 : i64} {
  func.func @_conv3x3_kernel(%arg0: i32, %arg1: i32, %arg2: i32, %arg3: memref<1x1x18x18x3xf32, #tpu.memory_space<vmem>>, %arg4: memref<27x64xf32, #tpu.memory_space<vmem>>, %arg5: memref<1x64xf32, #tpu.memory_space<vmem>>, %arg6: memref<1x16x16x64xf32, #tpu.memory_space<vmem>>) attributes {dimension_semantics = [#tpu.dimension_semantics<parallel>, #tpu.dimension_semantics<parallel>, #tpu.dimension_semantics<parallel>], iteration_bounds = array<i64: 2, 1, 1>, scalar_prefetch = 0 : i64, scratch_operands = 0 : i64, tpu.core_type = #tpu.core_type<tc>, window_params = [{transform_indices = @transform_0, window_bounds = array<i64: 1, 1, 18, 18, 3>}, {transform_indices = @transform_1, window_bounds = array<i64: 27, 64>}, {transform_indices = @transform_2, window_bounds = array<i64: 1, 64>}, {transform_indices = @transform_3, window_bounds = array<i64: 1, 16, 16, 64>}]} {
    %c0 = arith.constant 0 : index
    %c0_0 = arith.constant 0 : index
    %c0_1 = arith.constant 0 : index
    %c0_2 = arith.constant 0 : index
    %c0_3 = arith.constant 0 : index
    %0 = vector.load %arg3[%c0, %c0_0, %c0_1, %c0_2, %c0_3] : memref<1x1x18x18x3xf32, #tpu.memory_space<vmem>>, vector<1x1x18x18x3xf32>
    %1 = vector.shape_cast %0 : vector<1x1x18x18x3xf32> to vector<18x18x3xf32>
    %2 = vector.extract_strided_slice %1 {offsets = [0, 0, 0], sizes = [16, 16, 3], strides = [1, 1, 1]} : vector<18x18x3xf32> to vector<16x16x3xf32>
    %3 = vector.shape_cast %2 : vector<16x16x3xf32> to vector<256x3xf32>
    %4 = vector.extract_strided_slice %1 {offsets = [0, 1, 0], sizes = [16, 16, 3], strides = [1, 1, 1]} : vector<18x18x3xf32> to vector<16x16x3xf32>
    %5 = vector.shape_cast %4 : vector<16x16x3xf32> to vector<256x3xf32>
    %6 = vector.extract_strided_slice %1 {offsets = [0, 2, 0], sizes = [16, 16, 3], strides = [1, 1, 1]} : vector<18x18x3xf32> to vector<16x16x3xf32>
    %7 = vector.shape_cast %6 : vector<16x16x3xf32> to vector<256x3xf32>
    %8 = vector.extract_strided_slice %1 {offsets = [1, 0, 0], sizes = [16, 16, 3], strides = [1, 1, 1]} : vector<18x18x3xf32> to vector<16x16x3xf32>
    %9 = vector.shape_cast %8 : vector<16x16x3xf32> to vector<256x3xf32>
    %10 = vector.extract_strided_slice %1 {offsets = [1, 1, 0], sizes = [16, 16, 3], strides = [1, 1, 1]} : vector<18x18x3xf32> to vector<16x16x3xf32>
    %11 = vector.shape_cast %10 : vector<16x16x3xf32> to vector<256x3xf32>
    %12 = vector.extract_strided_slice %1 {offsets = [1, 2, 0], sizes = [16, 16, 3], strides = [1, 1, 1]} : vector<18x18x3xf32> to vector<16x16x3xf32>
    %13 = vector.shape_cast %12 : vector<16x16x3xf32> to vector<256x3xf32>
    %14 = vector.extract_strided_slice %1 {offsets = [2, 0, 0], sizes = [16, 16, 3], strides = [1, 1, 1]} : vector<18x18x3xf32> to vector<16x16x3xf32>
    %15 = vector.shape_cast %14 : vector<16x16x3xf32> to vector<256x3xf32>
    %16 = vector.extract_strided_slice %1 {offsets = [2, 1, 0], sizes = [16, 16, 3], strides = [1, 1, 1]} : vector<18x18x3xf32> to vector<16x16x3xf32>
    %17 = vector.shape_cast %16 : vector<16x16x3xf32> to vector<256x3xf32>
    %18 = vector.extract_strided_slice %1 {offsets = [2, 2, 0], sizes = [16, 16, 3], strides = [1, 1, 1]} : vector<18x18x3xf32> to vector<16x16x3xf32>
    %19 = vector.shape_cast %18 : vector<16x16x3xf32> to vector<256x3xf32>
    %20 = tpu.concatenate %3, %5, %7, %9, %11, %13, %15, %17, %19 in 1 : vector<256x3xf32>, vector<256x3xf32>, vector<256x3xf32>, vector<256x3xf32>, vector<256x3xf32>, vector<256x3xf32>, vector<256x3xf32>, vector<256x3xf32>, vector<256x3xf32> -> vector<256x27xf32>
    %c0_4 = arith.constant 0 : index
    %c0_5 = arith.constant 0 : index
    %21 = vector.load %arg4[%c0_4, %c0_5] : memref<27x64xf32, #tpu.memory_space<vmem>>, vector<27x64xf32>
    %cst = arith.constant dense<0.000000e+00> : vector<256x64xf32>
    %22 = tpu.matmul %20, %21, %cst {dimension_numbers = #tpu.dot_dimension_numbers<[1], [0], [0], [1], [0, 0, 1, 1], [], []>} : vector<256x27xf32>, vector<27x64xf32>, vector<256x64xf32> -> vector<256x64xf32>
    %c0_6 = arith.constant 0 : index
    %c0_7 = arith.constant 0 : index
    %23 = vector.load %arg5[%c0_6, %c0_7] : memref<1x64xf32, #tpu.memory_space<vmem>>, vector<1x64xf32>
    %24 = vector.broadcast %23 : vector<1x64xf32> to vector<256x64xf32>
    %25 = arith.addf %22, %24 : vector<256x64xf32>
    %cst_8 = arith.constant 0.000000e+00 : f32
    %26 = vector.broadcast %cst_8 : f32 to vector<256x64xf32>
    %27 = arith.maximumf %25, %26 : vector<256x64xf32>
    %28 = vector.shape_cast %27 : vector<256x64xf32> to vector<16x16x64xf32>
    %c0_9 = arith.constant 0 : index
    %c0_10 = arith.constant 0 : index
    %c0_11 = arith.constant 0 : index
    %c0_12 = arith.constant 0 : index
    %29 = vector.load %arg6[%c0_9, %c0_10, %c0_11, %c0_12] : memref<1x16x16x64xf32, #tpu.memory_space<vmem>>, vector<1x16x16x64xf32>
    %30 = vector.shape_cast %29 : vector<1x16x16x64xf32> to vector<16x16x64xf32>
    %31 = vector.shape_cast %28 : vector<16x16x64xf32> to vector<1x16x16x64xf32>
    tpu.vector_store %arg6[%c0_9, %c0_10, %c0_11, %c0_12], %31 {strides = array<i32>} : memref<1x16x16x64xf32, #tpu.memory_space<vmem>>, vector<1x16x16x64xf32>,
    return
  }
  func.func @transform_0(%arg0: i32, %arg1: i32, %arg2: i32) -> (i32, i32, i32, i32, i32) {
    %c0_i32 = arith.constant 0 : i32
    %c0_i32_0 = arith.constant 0 : i32
    %c0_i32_1 = arith.constant 0 : i32
    %c0_i32_2 = arith.constant 0 : i32
    return %arg0, %arg1, %c0_i32, %c0_i32_0, %c0_i32_1 : i32, i32, i32, i32, i32
  }
  func.func @transform_1(%arg0: i32, %arg1: i32, %arg2: i32) -> (i32, i32) {
    %c0_i32 = arith.constant 0 : i32
    %c0_i32_0 = arith.constant 0 : i32
    return %c0_i32, %arg2 : i32, i32
  }
  func.func @transform_2(%arg0: i32, %arg1: i32, %arg2: i32) -> (i32, i32) {
    %c0_i32 = arith.constant 0 : i32
    %c0_i32_0 = arith.constant 0 : i32
    return %c0_i32, %arg2 : i32, i32
  }
  func.func @transform_3(%arg0: i32, %arg1: i32, %arg2: i32) -> (i32, i32, i32, i32) {
    %c0_i32 = arith.constant 0 : i32
    %c0_i32_0 = arith.constant 0 : i32
    return %arg0, %arg1, %c0_i32, %arg2 : i32, i32, i32, i32
  }
}

</mosaic_0001>

<llo_original>
// kernel: tpu_custom_call.1
$region0: #{tpu_custom_call.1}
  #allocation0 [shape = 'u32[]', space=smem, size = 0x4, offset = 0x4, fixed_abs, tag = 'smem constant byte address 0x4 - core index']
  #allocation1 [shape = 'u32[144,128]{1,0:T(1,128)}', space=vmem, size = 0x12000, scoped, tag = 'internal scratch']
  %s0 = inlined_call_operand.vmem [shape: f32[2,1,18,18,3], index: 0, kind: input, shape index: {}]
  %s1 = inlined_call_operand.vmem [shape: f32[27,64], index: 1, kind: input, shape index: {}]
  %s2 = inlined_call_operand.vmem [shape: f32[1,64], index: 2, kind: input, shape index: {}]
  %s3 = inlined_call_operand.hbm [shape: f32[2,16,16,64], index: 3, kind: output, shape index: {}]
  %s4 = sld [smem:[#allocation0]]
  $region45: #{tpu_custom_call.1} parent=0
    _
  %s6 = ssub.s32 1, %s4
  %s7 = scalar_select 0, %s6, %s4
  $region1: #{tpu_custom_call.1} parent=0
    #allocation2 [shape = 'u8[262144]{0}', space=vmem, size = 0x40000, scoped, tag = 'output window, operand 0']
    #allocation3 [shape = 's32[2]{0}', space=sflag, size = 0x8, scoped, tag = 'scoped memory for tpu_custom_call.1']
    %8 = vsyncpa [#allocation3], 0
    %s9 = scalar_lea.sflag [#allocation3], 1
    %10 = vsyncpa %s9, 0
    loop: start=0, step=1, limit=4
    $region2: #{tpu_custom_call.1} parent=1 // loop_pre_header
      _
    $region3: #{tpu_custom_call.1} parent=1 // loop_header
      %s12 = sphi 0, %s16
      %p13 = scmp.ge.s32.totalorder %s12, 4
      %s19 = sphi 0, %s38
      %s20 = sphi 0, %s34
      %s21 = sphi 0, %s30
      %s22 = sphi 0, %s19
      %s23 = sphi 0, %s20
      %s24 = sphi 0, %s21
      %s25 = sphi 0, %s22
      %s26 = sphi 0, %s23
      %s27 = sphi 0, %s24
      %s43 = sphi 0, %s45
      %s46 = sphi 0, %s43
      %s47 = sphi 0, %s46
      %s63 = sphi 0, %s47
      %s69 = sphi 0, %s71
      %s72 = sphi 0, %s69
      %s73 = sphi 0, %s72
      %s89 = sphi 0, %s73
      %s95 = sphi 0, %s97
      %s98 = sphi 0, %s95
      %s99 = sphi 0, %s98
      %s115 = sphi 0, %s99
      %s125 = sphi 0, %s127
      %s128 = sphi 0, %s125
      %s129 = sphi 0, %s128
      %s145 = sphi 0, %s129
    $region4: #{tpu_custom_call.1} parent=1 // loop_header_branch
      %15 = sbr.rel (%p13) target = $region8
    $region5: #{tpu_custom_call.1} parent=1 // loop_body
      %s17 = ssub.s32 %s12, 1
      %s18 = ssub.s32 %s12, 2
      %s28 = sadd.s32 1, %s21
      %p29 = scmp.ge.s32.totalorder %s28, 1
      %s30 = scalar_select %p29, 0, %s28
      %s31 = sadd.s32 1, %s20
      %s32 = scalar_select %p29, %s31, %s20
      %p33 = scmp.ge.s32.totalorder %s32, 1
      %s34 = scalar_select %p33, 0, %s32
      %s35 = sadd.s32 1, %s19
      %s36 = scalar_select %p33, %s35, %s19
      %p37 = scmp.ge.s32.totalorder %s36, 2
      %s38 = scalar_select %p37, 0, %s36
      %s39 = ssub.s32 %s19, %s38
      %s40 = ssub.s32 %s20, %s34
      %s41 = sor.u32 %s39, %s40
      %p42 = scmp.eq.s32.totalorder %s41, 0
      %s44 = sadd.s32 %s43, 1
      %s45 = scalar_select %p42, %s43, %s44
      %p48 = pneg %p42
      %p49 = scmp.eq.s32.totalorder %s12, 1
      %p50 = por %p48, %p49
      %p51 = scmp.ne.s32.totalorder %s43, %s46
      %p52 = scmp.eq.s32.totalorder %s12, 0
      %p53 = por %p51, %p52
      %p54 = scmp.ne.s32.totalorder %s43, %s46
      %p55 = scmp.eq.s32.totalorder %s17, 1
      %p56 = por %p54, %p55
      %p57 = scmp.ne.s32.totalorder %s46, %s47
      %p58 = scmp.eq.s32.totalorder %s17, 0
      %p59 = por %p57, %p58
      %p60 = scmp.ne.s32.totalorder %s46, %s47
      %p61 = scmp.eq.s32.totalorder %s18, 1
      %p62 = por %p60, %p61
      %p64 = scmp.ne.s32.totalorder %s47, %s63
      %p65 = scmp.eq.s32.totalorder %s18, 0
      %p66 = por %p64, %p65
      %s67 = ssub.s32 %s21, %s30
      %p68 = scmp.eq.s32.totalorder %s67, 0
      %s70 = sadd.s32 %s69, 1
      %s71 = scalar_select %p68, %s69, %s70
      %p74 = pneg %p68
      %p75 = scmp.eq.s32.totalorder %s12, 1
      %p76 = por %p74, %p75
      %p77 = scmp.ne.s32.totalorder %s69, %s72
      %p78 = scmp.eq.s32.totalorder %s12, 0
      %p79 = por %p77, %p78
      %p80 = scmp.ne.s32.totalorder %s69, %s72
      %p81 = scmp.eq.s32.totalorder %s17, 1
      %p82 = por %p80, %p81
      %p83 = scmp.ne.s32.totalorder %s72, %s73
      %p84 = scmp.eq.s32.totalorder %s17, 0
      %p85 = por %p83, %p84
      %p86 = scmp.ne.s32.totalorder %s72, %s73
      %p87 = scmp.eq.s32.totalorder %s18, 1
      %p88 = por %p86, %p87
      %p90 = scmp.ne.s32.totalorder %s73, %s89
      %p91 = scmp.eq.s32.totalorder %s18, 0
      %p92 = por %p90, %p91
      %s93 = ssub.s32 %s21, %s30
      %p94 = scmp.eq.s32.totalorder %s93, 0
      %s96 = sadd.s32 %s95, 1
      %s97 = scalar_select %p94, %s95, %s96
      %p100 = pneg %p94
      %p101 = scmp.eq.s32.totalorder %s12, 1
      %p102 = por %p100, %p101
      %p103 = scmp.ne.s32.totalorder %s95, %s98
      %p104 = scmp.eq.s32.totalorder %s12, 0
      %p105 = por %p103, %p104
      %p106 = scmp.ne.s32.totalorder %s95, %s98
      %p107 = scmp.eq.s32.totalorder %s17, 1
      %p108 = por %p106, %p107
      %p109 = scmp.ne.s32.totalorder %s98, %s99
      %p110 = scmp.eq.s32.totalorder %s17, 0
      %p111 = por %p109, %p110
      %p112 = scmp.ne.s32.totalorder %s98, %s99
      %p113 = scmp.eq.s32.totalorder %s18, 1
      %p114 = por %p112, %p113
      %p116 = scmp.ne.s32.totalorder %s99, %s115
      %p117 = scmp.eq.s32.totalorder %s18, 0
      %p118 = por %p116, %p117
      %s119 = ssub.s32 %s19, %s38
      %s120 = ssub.s32 %s20, %s34
      %s121 = sor.u32 %s119, %s120
      %s122 = ssub.s32 %s21, %s30
      %s123 = sor.u32 %s121, %s122
      %p124 = scmp.eq.s32.totalorder %s123, 0
      %s126 = sadd.s32 %s125, 1
      %s127 = scalar_select %p124, %s125, %s126
      %p130 = pneg %p124
      %p131 = scmp.eq.s32.totalorder %s12, 1
      %p132 = por %p130, %p131
      %p133 = scmp.ne.s32.totalorder %s125, %s128
      %p134 = scmp.eq.s32.totalorder %s12, 0
      %p135 = por %p133, %p134
      %p136 = scmp.ne.s32.totalorder %s125, %s128
      %p137 = scmp.eq.s32.totalorder %s17, 1
      %p138 = por %p136, %p137
      %p139 = scmp.ne.s32.totalorder %s128, %s129
      %p140 = scmp.eq.s32.totalorder %s17, 0
      %p141 = por %p139, %p140
      %p142 = scmp.ne.s32.totalorder %s128, %s129
      %p143 = scmp.eq.s32.totalorder %s18, 1
      %p144 = por %p142, %p143
      %p146 = scmp.ne.s32.totalorder %s129, %s145
      %p147 = scmp.eq.s32.totalorder %s18, 0
      %p148 = por %p146, %p147
      %p149 = scmp.le.s32.totalorder 1, %s12
      %p150 = scmp.lt.s32.totalorder %s12, 3
      %p151 = pnand %p149, %p150
      %p152 = pneg %p151
      // Predicated region
      $region9: #{tpu_custom_call.1} parent=5 // pred_check
        _
      $region10: #{tpu_custom_call.1} parent=5 // pred_check_branch
        %154 = sbr.rel (%p151) target = $region12
      $region11: #{tpu_custom_call.1} parent=5 // pred_region
        %s155 = ssub.s32 %s12, 1
        // Predicated region
        $region13: #{tpu_custom_call.1} parent=11 // pred_check
          %p156 = pneg %p85
        $region14: #{tpu_custom_call.1} parent=11 // pred_check_branch
          %158 = sbr.rel (%p156) target = $region16
        $region15: #{tpu_custom_call.1} parent=11 // pred_region
          %p159 = scmp.lt.s32.totalorder %s24, 0
          %s160 = scalar_select %p159, %s24, 0
          %s161 = smul.addr %s160, 8
          %s162 = scalar_lea.vmem %s1, %s161
        $region16: #{tpu_custom_call.1} parent=11 // pred_fallthru
          _
        // Predicated region
        $region17: #{tpu_custom_call.1} parent=11 // pred_check
          %p163 = pneg %p111
        $region18: #{tpu_custom_call.1} parent=11 // pred_check_branch
          %165 = sbr.rel (%p163) target = $region20
        $region19: #{tpu_custom_call.1} parent=11 // pred_region
          %p166 = scmp.lt.s32.totalorder %s24, 0
          %s167 = scalar_select %p166, %s24, 0
          %s168 = scalar_lea.vmem %s2, %s167
        $region20: #{tpu_custom_call.1} parent=11 // pred_fallthru
          _
      $region12: #{tpu_custom_call.1} parent=5 // pred_fallthru
        _
      %p169 = scmp.lt.s32.totalorder %s12, 2
      // Predicated region
      $region21: #{tpu_custom_call.1} parent=5 // pred_check
        %p170 = pneg %p169
      $region22: #{tpu_custom_call.1} parent=5 // pred_check_branch
        %172 = sbr.rel (%p170) target = $region24
      $region23: #{tpu_custom_call.1} parent=5 // pred_region
        // Predicated region
        $region25: #{tpu_custom_call.1} parent=23 // pred_check
          %p173 = pneg %p53
        $region26: #{tpu_custom_call.1} parent=23 // pred_check_branch
          %175 = sbr.rel (%p173) target = $region28
        $region27: #{tpu_custom_call.1} parent=23 // pred_region
          %p176 = scmp.lt.s32.totalorder %s19, 1
          %s177 = scalar_select %p176, %s19, 1
          %p178 = scmp.lt.s32.totalorder %s20, 0
          %s179 = scalar_select %p178, %s20, 0
          %s180 = smul.addr %s179, 54
          %s181 = smul.addr %s177, 54
          %s182 = sadd.s32 %s180, %s181
          %s183 = smul.addr %s182, 8
          %s184 = scalar_lea.vmem %s0, %s183
        $region28: #{tpu_custom_call.1} parent=23 // pred_fallthru
          _
      $region24: #{tpu_custom_call.1} parent=5 // pred_fallthru
        _
      %p185 = scmp.le.s32.totalorder 1, %s12
      %p186 = scmp.lt.s32.totalorder %s12, 3
      %p187 = pnand %p185, %p186
      %p188 = pneg %p187
      // Predicated region
      $region29: #{tpu_custom_call.1} parent=5 // pred_check
        _
      $region30: #{tpu_custom_call.1} parent=5 // pred_check_branch
        %190 = sbr.rel (%p187) target = $region32
      $region31: #{tpu_custom_call.1} parent=5 // pred_region
        %s191 = ssub.s32 %s12, 1
        %p192 = scmp.lt.s32.totalorder %s22, 1
        %s193 = scalar_select %p192, %s22, 1
        %p194 = scmp.lt.s32.totalorder %s23, 0
        %s195 = scalar_select %p194, %s23, 0
        %s196 = smul.addr %s195, 54
        %s197 = smul.addr %s193, 54
        %s198 = sadd.s32 %s196, %s197
        %s199 = smul.addr %s198, 8
        %s200 = scalar_lea.vmem %s0, %s199
        %p201 = pneg %p59
        %p202 = pneg %p56
        %p203 = scmp.lt.s32.totalorder %s24, 0
        %s204 = scalar_select %p203, %s24, 0
        %s205 = smul.addr %s204, 8
        %s206 = scalar_lea.vmem %s1, %s205
        %p207 = pneg %p85
        %p208 = pneg %p82
        %p209 = scmp.lt.s32.totalorder %s24, 0
        %s210 = scalar_select %p209, %s24, 0
        %s211 = scalar_lea.vmem %s2, %s210
        %p212 = pneg %p111
        %p213 = pneg %p108
        %p214 = pneg %p141
        %p215 = pneg %p138
        %s216 = sand.u32 %s128, 1
        %s217 = scalar_lea.sflag [#allocation3], %s216
        %s218 = sand.u32 %s128, 1
        %s219 = smul.addr %s218, 256
        %s220 = scalar_lea.vmem [#allocation2], %s219
        %p221 = scmp.lt.s32.totalorder %s22, 1
        %s222 = scalar_select %p221, %s22, 1
        %p223 = scmp.lt.s32.totalorder %s23, 0
        %s224 = scalar_select %p223, %s23, 0
        %s225 = smul.addr %s224, 54
        %s226 = smul.addr %s222, 54
        %s227 = sadd.s32 %s225, %s226
        %s228 = smul.addr %s227, 8
        %s229 = scalar_lea.vmem %s0, %s228
        %p230 = scmp.lt.s32.totalorder %s24, 0
        %s231 = scalar_select %p230, %s24, 0
        %s232 = smul.addr %s231, 8
        %s233 = scalar_lea.vmem %s1, %s232
        %p234 = scmp.lt.s32.totalorder %s24, 0
        %s235 = scalar_select %p234, %s24, 0
        %s236 = scalar_lea.vmem %s2, %s235
        %s237 = smul.u32 16, %s23
        %v238 = vld [vmem:[%s229] sm:$0xff]
        %v239 = vld [vmem:[%s229 + $0x8] sm:$0xff]
        %v240 = vld [vmem:[%s229 + $0x10] sm:$0x3]
        %v241 = vld [vmem:[%s229 + $0x18] sm:$0xff]
        %v242 = vld [vmem:[%s229 + $0x20] sm:$0xff]
        %v243 = vld [vmem:[%s229 + $0x28] sm:$0x3]
        %v244 = vld [vmem:[%s229 + $0x30] sm:$0xff]
        %v245 = vld [vmem:[%s229 + $0x38] sm:$0xff]
        %v246 = vld [vmem:[%s229 + $0x40] sm:$0x3]
        %v247 = vld [vmem:[%s229 + $0x48] sm:$0xff]
        %v248 = vld [vmem:[%s229 + $0x50] sm:$0xff]
        %v249 = vld [vmem:[%s229 + $0x58] sm:$0x3]
        %v250 = vld [vmem:[%s229 + $0x60] sm:$0xff]
        %v251 = vld [vmem:[%s229 + $0x68] sm:$0xff]
        %v252 = vld [vmem:[%s229 + $0x70] sm:$0x3]
        %v253 = vld [vmem:[%s229 + $0x78] sm:$0xff]
        %v254 = vld [vmem:[%s229 + $0x80] sm:$0xff]
        %v255 = vld [vmem:[%s229 + $0x88] sm:$0x3]
        %v256 = vld [vmem:[%s229 + $0x90] sm:$0xff]
        %v257 = vld [vmem:[%s229 + $0x98] sm:$0xff]
        %v258 = vld [vmem:[%s229 + $0xa0] sm:$0x3]
        %v259 = vld [vmem:[%s229 + $0xa8] sm:$0xff]
        %v260 = vld [vmem:[%s229 + $0xb0] sm:$0xff]
        %v261 = vld [vmem:[%s229 + $0xb8] sm:$0x3]
        %v262 = vld [vmem:[%s229 + $0xc0] sm:$0xff]
        %v263 = vld [vmem:[%s229 + $0xc8] sm:$0xff]
        %v264 = vld [vmem:[%s229 + $0xd0] sm:$0x3]
        %v265 = vld [vmem:[%s229 + $0xd8] sm:$0xff]
        %v266 = vld [vmem:[%s229 + $0xe0] sm:$0xff]
        %v267 = vld [vmem:[%s229 + $0xe8] sm:$0x3]
        %v268 = vld [vmem:[%s229 + $0xf0] sm:$0xff]
        %v269 = vld [vmem:[%s229 + $0xf8] sm:$0xff]
        %v270 = vld [vmem:[%s229 + $0x100] sm:$0x3]
        %v271 = vld [vmem:[%s229 + $0x108] sm:$0xff]
        %v272 = vld [vmem:[%s229 + $0x110] sm:$0xff]
        %v273 = vld [vmem:[%s229 + $0x118] sm:$0x3]
        %v274 = vld [vmem:[%s229 + $0x120] sm:$0xff]
        %v275 = vld [vmem:[%s229 + $0x128] sm:$0xff]
        %v276 = vld [vmem:[%s229 + $0x130] sm:$0x3]
        %v277 = vld [vmem:[%s229 + $0x138] sm:$0xff]
        %v278 = vld [vmem:[%s229 + $0x140] sm:$0xff]
        %v279 = vld [vmem:[%s229 + $0x148] sm:$0x3]
        %v280 = vld [vmem:[%s229 + $0x150] sm:$0xff]
        %v281 = vld [vmem:[%s229 + $0x158] sm:$0xff]
        %v282 = vld [vmem:[%s229 + $0x160] sm:$0x3]
        %v283 = vld [vmem:[%s229 + $0x168] sm:$0xff]
        %v284 = vld [vmem:[%s229 + $0x170] sm:$0xff]
        %v285 = vld [vmem:[%s229 + $0x178] sm:$0x3]
        %v286 = vld [vmem:[%s229 + $0x180] sm:$0xff]
        %v287 = vld [vmem:[%s229 + $0x188] sm:$0xff]
        %v288 = vld [vmem:[%s229 + $0x190] sm:$0x3]
        %v289 = vld [vmem:[%s229 + $0x198] sm:$0xff]
        %v290 = vld [vmem:[%s229 + $0x1a0] sm:$0xff]
        %v291 = vld [vmem:[%s229 + $0x1a8] sm:$0x3]
        %vm340 = vcmask 1046528
        %v341 = vrot.slane %v238, 1
        %v342 = vrot.slane %v239, 1
        %v343 = vsel %vm340, %v341, %v342
        %v344 = vrot.slane %v240, 1
        %v345 = vsel %vm340, %v342, %v344
        %v346 = vrot.slane %v241, 1
        %v347 = vrot.slane %v242, 1
        %v348 = vsel %vm340, %v346, %v347
        %v349 = vrot.slane %v243, 1
        %v350 = vsel %vm340, %v347, %v349
        %v351 = vrot.slane %v244, 1
        %v352 = vrot.slane %v245, 1
        %v353 = vsel %vm340, %v351, %v352
        %v354 = vrot.slane %v246, 1
        %v355 = vsel %vm340, %v352, %v354
        %v356 = vrot.slane %v247, 1
        %v357 = vrot.slane %v248, 1
        %v358 = vsel %vm340, %v356, %v357
        %v359 = vrot.slane %v249, 1
        %v360 = vsel %vm340, %v357, %v359
        %v361 = vrot.slane %v250, 1
        %v362 = vrot.slane %v251, 1
        %v363 = vsel %vm340, %v361, %v362
        %v364 = vrot.slane %v252, 1
        %v365 = vsel %vm340, %v362, %v364
        %v366 = vrot.slane %v253, 1
        %v367 = vrot.slane %v254, 1
        %v368 = vsel %vm340, %v366, %v367
        %v369 = vrot.slane %v255, 1
        %v370 = vsel %vm340, %v367, %v369
        %v371 = vrot.slane %v256, 1
        %v372 = vrot.slane %v257, 1
        %v373 = vsel %vm340, %v371, %v372
        %v374 = vrot.slane %v258, 1
        %v375 = vsel %vm340, %v372, %v374
        %v376 = vrot.slane %v259, 1
        %v377 = vrot.slane %v260, 1
        %v378 = vsel %vm340, %v376, %v377
        %v379 = vrot.slane %v261, 1
        %v380 = vsel %vm340, %v377, %v379
        %v381 = vrot.slane %v262, 1
        %v382 = vrot.slane %v263, 1
        %v383 = vsel %vm340, %v381, %v382
        %v384 = vrot.slane %v264, 1
        %v385 = vsel %vm340, %v382, %v384
        %v386 = vrot.slane %v265, 1
        %v387 = vrot.slane %v266, 1
        %v388 = vsel %vm340, %v386, %v387
        %v389 = vrot.slane %v267, 1
        %v390 = vsel %vm340, %v387, %v389
        %v391 = vrot.slane %v268, 1
        %v392 = vrot.slane %v269, 1
        %v393 = vsel %vm340, %v391, %v392
        %v394 = vrot.slane %v270, 1
        %v395 = vsel %vm340, %v392, %v394
        %v396 = vrot.slane %v271, 1
        %v397 = vrot.slane %v272, 1
        %v398 = vsel %vm340, %v396, %v397
        %v399 = vrot.slane %v273, 1
        %v400 = vsel %vm340, %v397, %v399
        %v401 = vrot.slane %v274, 1
        %v402 = vrot.slane %v275, 1
        %v403 = vsel %vm340, %v401, %v402
        %v404 = vrot.slane %v276, 1
        %v405 = vsel %vm340, %v402, %v404
        %v406 = vrot.slane %v277, 1
        %v407 = vrot.slane %v278, 1
        %v408 = vsel %vm340, %v406, %v407
        %v409 = vrot.slane %v279, 1
        %v410 = vsel %vm340, %v407, %v409
        %v411 = vrot.slane %v280, 1
        %v412 = vrot.slane %v281, 1
        %v413 = vsel %vm340, %v411, %v412
        %v414 = vrot.slane %v282, 1
        %v415 = vsel %vm340, %v412, %v414
        %v416 = vrot.slane %v283, 1
        %v417 = vrot.slane %v284, 1
        %v418 = vsel %vm340, %v416, %v417
        %v419 = vrot.slane %v285, 1
        %v420 = vsel %vm340, %v417, %v419
        %vm421 = vcmask 1045504
        %v422 = vrot.slane %v238, 2
        %v423 = vrot.slane %v239, 2
        %v424 = vsel %vm421, %v422, %v423
        %v425 = vrot.slane %v240, 2
        %v426 = vsel %vm421, %v423, %v425
        %v427 = vrot.slane %v241, 2
        %v428 = vrot.slane %v242, 2
        %v429 = vsel %vm421, %v427, %v428
        %v430 = vrot.slane %v243, 2
        %v431 = vsel %vm421, %v428, %v430
        %v432 = vrot.slane %v244, 2
        %v433 = vrot.slane %v245, 2
        %v434 = vsel %vm421, %v432, %v433
        %v435 = vrot.slane %v246, 2
        %v436 = vsel %vm421, %v433, %v435
        %v437 = vrot.slane %v247, 2
        %v438 = vrot.slane %v248, 2
        %v439 = vsel %vm421, %v437, %v438
        %v440 = vrot.slane %v249, 2
        %v441 = vsel %vm421, %v438, %v440
        %v442 = vrot.slane %v250, 2
        %v443 = vrot.slane %v251, 2
        %v444 = vsel %vm421, %v442, %v443
        %v445 = vrot.slane %v252, 2
        %v446 = vsel %vm421, %v443, %v445
        %v447 = vrot.slane %v253, 2
        %v448 = vrot.slane %v254, 2
        %v449 = vsel %vm421, %v447, %v448
        %v450 = vrot.slane %v255, 2
        %v451 = vsel %vm421, %v448, %v450
        %v452 = vrot.slane %v256, 2
        %v453 = vrot.slane %v257, 2
        %v454 = vsel %vm421, %v452, %v453
        %v455 = vrot.slane %v258, 2
        %v456 = vsel %vm421, %v453, %v455
        %v457 = vrot.slane %v259, 2
        %v458 = vrot.slane %v260, 2
        %v459 = vsel %vm421, %v457, %v458
        %v460 = vrot.slane %v261, 2
        %v461 = vsel %vm421, %v458, %v460
        %v462 = vrot.slane %v262, 2
        %v463 = vrot.slane %v263, 2
        %v464 = vsel %vm421, %v462, %v463
        %v465 = vrot.slane %v264, 2
        %v466 = vsel %vm421, %v463, %v465
        %v467 = vrot.slane %v265, 2
        %v468 = vrot.slane %v266, 2
        %v469 = vsel %vm421, %v467, %v468
        %v470 = vrot.slane %v267, 2
        %v471 = vsel %vm421, %v468, %v470
        %v472 = vrot.slane %v268, 2
        %v473 = vrot.slane %v269, 2
        %v474 = vsel %vm421, %v472, %v473
        %v475 = vrot.slane %v270, 2
        %v476 = vsel %vm421, %v473, %v475
        %v477 = vrot.slane %v271, 2
        %v478 = vrot.slane %v272, 2
        %v479 = vsel %vm421, %v477, %v478
        %v480 = vrot.slane %v273, 2
        %v481 = vsel %vm421, %v478, %v480
        %v482 = vrot.slane %v274, 2
        %v483 = vrot.slane %v275, 2
        %v484 = vsel %vm421, %v482, %v483
        %v485 = vrot.slane %v276, 2
        %v486 = vsel %vm421, %v483, %v485
        %v487 = vrot.slane %v277, 2
        %v488 = vrot.slane %v278, 2
        %v489 = vsel %vm421, %v487, %v488
        %v490 = vrot.slane %v279, 2
        %v491 = vsel %vm421, %v488, %v490
        %v492 = vrot.slane %v280, 2
        %v493 = vrot.slane %v281, 2
        %v494 = vsel %vm421, %v492, %v493
        %v495 = vrot.slane %v282, 2
        %v496 = vsel %vm421, %v493, %v495
        %v497 = vrot.slane %v283, 2
        %v498 = vrot.slane %v284, 2
        %v499 = vsel %vm421, %v497, %v498
        %v500 = vrot.slane %v285, 2
        %v501 = vsel %vm421, %v498, %v500
        %v505 = vrot.slane %v286, 1
        %v506 = vrot.slane %v287, 1
        %v507 = vsel %vm340, %v505, %v506
        %v508 = vrot.slane %v288, 1
        %v509 = vsel %vm340, %v506, %v508
        %v510 = vrot.slane %v286, 2
        %v511 = vrot.slane %v287, 2
        %v512 = vsel %vm421, %v510, %v511
        %v513 = vrot.slane %v288, 2
        %v514 = vsel %vm421, %v511, %v513
        %v518 = vrot.slane %v289, 1
        %v519 = vrot.slane %v290, 1
        %v520 = vsel %vm340, %v518, %v519
        %v521 = vrot.slane %v291, 1
        %v522 = vsel %vm340, %v519, %v521
        %v523 = vrot.slane %v289, 2
        %v524 = vrot.slane %v290, 2
        %v525 = vsel %vm421, %v523, %v524
        %v526 = vrot.slane %v291, 2
        %v527 = vsel %vm421, %v524, %v526
        %528 = vrot.lane.b32.xlu0 %v343, 3
        %v529 = vpop.permute.xlu0 %528
        %530 = vrot.lane.b32.xlu0 %v345, 3
        %v531 = vpop.permute.xlu0 %530
        %532 = vrot.lane.b32.xlu0 %v348, 3
        %v533 = vpop.permute.xlu0 %532
        %534 = vrot.lane.b32.xlu0 %v350, 3
        %v535 = vpop.permute.xlu0 %534
        %536 = vrot.lane.b32.xlu0 %v353, 3
        %v537 = vpop.permute.xlu0 %536
        %538 = vrot.lane.b32.xlu0 %v355, 3
        %v539 = vpop.permute.xlu0 %538
        %540 = vrot.lane.b32.xlu0 %v358, 3
        %v541 = vpop.permute.xlu0 %540
        %542 = vrot.lane.b32.xlu0 %v360, 3
        %v543 = vpop.permute.xlu0 %542
        %544 = vrot.lane.b32.xlu0 %v363, 3
        %v545 = vpop.permute.xlu0 %544
        %546 = vrot.lane.b32.xlu0 %v365, 3
        %v547 = vpop.permute.xlu0 %546
        %548 = vrot.lane.b32.xlu0 %v368, 3
        %v549 = vpop.permute.xlu0 %548
        %550 = vrot.lane.b32.xlu0 %v370, 3
        %v551 = vpop.permute.xlu0 %550
        %552 = vrot.lane.b32.xlu0 %v373, 3
        %v553 = vpop.permute.xlu0 %552
        %554 = vrot.lane.b32.xlu0 %v375, 3
        %v555 = vpop.permute.xlu0 %554
        %556 = vrot.lane.b32.xlu0 %v378, 3
        %v557 = vpop.permute.xlu0 %556
        %558 = vrot.lane.b32.xlu0 %v380, 3
        %v559 = vpop.permute.xlu0 %558
        %560 = vrot.lane.b32.xlu0 %v383, 3
        %v561 = vpop.permute.xlu0 %560
        %562 = vrot.lane.b32.xlu0 %v385, 3
        %v563 = vpop.permute.xlu0 %562
        %564 = vrot.lane.b32.xlu0 %v388, 3
        %v565 = vpop.permute.xlu0 %564
        %566 = vrot.lane.b32.xlu0 %v390, 3
        %v567 = vpop.permute.xlu0 %566
        %568 = vrot.lane.b32.xlu0 %v393, 3
        %v569 = vpop.permute.xlu0 %568
        %570 = vrot.lane.b32.xlu0 %v395, 3
        %v571 = vpop.permute.xlu0 %570
        %572 = vrot.lane.b32.xlu0 %v398, 3
        %v573 = vpop.permute.xlu0 %572
        %574 = vrot.lane.b32.xlu0 %v400, 3
        %v575 = vpop.permute.xlu0 %574
        %576 = vrot.lane.b32.xlu0 %v403, 3
        %v577 = vpop.permute.xlu0 %576
        %578 = vrot.lane.b32.xlu0 %v405, 3
        %v579 = vpop.permute.xlu0 %578
        %580 = vrot.lane.b32.xlu0 %v408, 3
        %v581 = vpop.permute.xlu0 %580
        %582 = vrot.lane.b32.xlu0 %v410, 3
        %v583 = vpop.permute.xlu0 %582
        %584 = vrot.lane.b32.xlu0 %v413, 3
        %v585 = vpop.permute.xlu0 %584
        %586 = vrot.lane.b32.xlu0 %v415, 3
        %v587 = vpop.permute.xlu0 %586
        %588 = vrot.lane.b32.xlu0 %v418, 3
        %v589 = vpop.permute.xlu0 %588
        %590 = vrot.lane.b32.xlu0 %v420, 3
        %v591 = vpop.permute.xlu0 %590
        %624 = vrot.lane.b32.xlu0 %v424, 6
        %v625 = vpop.permute.xlu0 %624
        %626 = vrot.lane.b32.xlu0 %v426, 6
        %v627 = vpop.permute.xlu0 %626
        %628 = vrot.lane.b32.xlu0 %v429, 6
        %v629 = vpop.permute.xlu0 %628
        %630 = vrot.lane.b32.xlu0 %v431, 6
        %v631 = vpop.permute.xlu0 %630
        %632 = vrot.lane.b32.xlu0 %v434, 6
        %v633 = vpop.permute.xlu0 %632
        %634 = vrot.lane.b32.xlu0 %v436, 6
        %v635 = vpop.permute.xlu0 %634
        %636 = vrot.lane.b32.xlu0 %v439, 6
        %v637 = vpop.permute.xlu0 %636
        %638 = vrot.lane.b32.xlu0 %v441, 6
        %v639 = vpop.permute.xlu0 %638
        %640 = vrot.lane.b32.xlu0 %v444, 6
        %v641 = vpop.permute.xlu0 %640
        %642 = vrot.lane.b32.xlu0 %v446, 6
        %v643 = vpop.permute.xlu0 %642
        %644 = vrot.lane.b32.xlu0 %v449, 6
        %v645 = vpop.permute.xlu0 %644
        %646 = vrot.lane.b32.xlu0 %v451, 6
        %v647 = vpop.permute.xlu0 %646
        %648 = vrot.lane.b32.xlu0 %v454, 6
        %v649 = vpop.permute.xlu0 %648
        %650 = vrot.lane.b32.xlu0 %v456, 6
        %v651 = vpop.permute.xlu0 %650
        %652 = vrot.lane.b32.xlu0 %v459, 6
        %v653 = vpop.permute.xlu0 %652
        %654 = vrot.lane.b32.xlu0 %v461, 6
        %v655 = vpop.permute.xlu0 %654
        %656 = vrot.lane.b32.xlu0 %v464, 6
        %v657 = vpop.permute.xlu0 %656
        %658 = vrot.lane.b32.xlu0 %v466, 6
        %v659 = vpop.permute.xlu0 %658
        %660 = vrot.lane.b32.xlu0 %v469, 6
        %v661 = vpop.permute.xlu0 %660
        %662 = vrot.lane.b32.xlu0 %v471, 6
        %v663 = vpop.permute.xlu0 %662
        %664 = vrot.lane.b32.xlu0 %v474, 6
        %v665 = vpop.permute.xlu0 %664
        %666 = vrot.lane.b32.xlu0 %v476, 6
        %v667 = vpop.permute.xlu0 %666
        %668 = vrot.lane.b32.xlu0 %v479, 6
        %v669 = vpop.permute.xlu0 %668
        %670 = vrot.lane.b32.xlu0 %v481, 6
        %v671 = vpop.permute.xlu0 %670
        %672 = vrot.lane.b32.xlu0 %v484, 6
        %v673 = vpop.permute.xlu0 %672
        %674 = vrot.lane.b32.xlu0 %v486, 6
        %v675 = vpop.permute.xlu0 %674
        %676 = vrot.lane.b32.xlu0 %v489, 6
        %v677 = vpop.permute.xlu0 %676
        %678 = vrot.lane.b32.xlu0 %v491, 6
        %v679 = vpop.permute.xlu0 %678
        %680 = vrot.lane.b32.xlu0 %v494, 6
        %v681 = vpop.permute.xlu0 %680
        %682 = vrot.lane.b32.xlu0 %v496, 6
        %v683 = vpop.permute.xlu0 %682
        %684 = vrot.lane.b32.xlu0 %v499, 6
        %v685 = vpop.permute.xlu0 %684
        %686 = vrot.lane.b32.xlu0 %v501, 6
        %v687 = vpop.permute.xlu0 %686
        %720 = vrot.lane.b32.xlu0 %v241, 9
        %v721 = vpop.permute.xlu0 %720
        %722 = vrot.lane.b32.xlu0 %v242, 9
        %v723 = vpop.permute.xlu0 %722
        %724 = vrot.lane.b32.xlu0 %v244, 9
        %v725 = vpop.permute.xlu0 %724
        %726 = vrot.lane.b32.xlu0 %v245, 9
        %v727 = vpop.permute.xlu0 %726
        %728 = vrot.lane.b32.xlu0 %v247, 9
        %v729 = vpop.permute.xlu0 %728
        %730 = vrot.lane.b32.xlu0 %v248, 9
        %v731 = vpop.permute.xlu0 %730
        %732 = vrot.lane.b32.xlu0 %v250, 9
        %v733 = vpop.permute.xlu0 %732
        %734 = vrot.lane.b32.xlu0 %v251, 9
        %v735 = vpop.permute.xlu0 %734
        %736 = vrot.lane.b32.xlu0 %v253, 9
        %v737 = vpop.permute.xlu0 %736
        %738 = vrot.lane.b32.xlu0 %v254, 9
        %v739 = vpop.permute.xlu0 %738
        %740 = vrot.lane.b32.xlu0 %v256, 9
        %v741 = vpop.permute.xlu0 %740
        %742 = vrot.lane.b32.xlu0 %v257, 9
        %v743 = vpop.permute.xlu0 %742
        %744 = vrot.lane.b32.xlu0 %v259, 9
        %v745 = vpop.permute.xlu0 %744
        %746 = vrot.lane.b32.xlu0 %v260, 9
        %v747 = vpop.permute.xlu0 %746
        %748 = vrot.lane.b32.xlu0 %v262, 9
        %v749 = vpop.permute.xlu0 %748
        %750 = vrot.lane.b32.xlu0 %v263, 9
        %v751 = vpop.permute.xlu0 %750
        %752 = vrot.lane.b32.xlu0 %v265, 9
        %v753 = vpop.permute.xlu0 %752
        %754 = vrot.lane.b32.xlu0 %v266, 9
        %v755 = vpop.permute.xlu0 %754
        %756 = vrot.lane.b32.xlu0 %v268, 9
        %v757 = vpop.permute.xlu0 %756
        %758 = vrot.lane.b32.xlu0 %v269, 9
        %v759 = vpop.permute.xlu0 %758
        %760 = vrot.lane.b32.xlu0 %v271, 9
        %v761 = vpop.permute.xlu0 %760
        %762 = vrot.lane.b32.xlu0 %v272, 9
        %v763 = vpop.permute.xlu0 %762
        %764 = vrot.lane.b32.xlu0 %v274, 9
        %v765 = vpop.permute.xlu0 %764
        %766 = vrot.lane.b32.xlu0 %v275, 9
        %v767 = vpop.permute.xlu0 %766
        %768 = vrot.lane.b32.xlu0 %v277, 9
        %v769 = vpop.permute.xlu0 %768
        %770 = vrot.lane.b32.xlu0 %v278, 9
        %v771 = vpop.permute.xlu0 %770
        %772 = vrot.lane.b32.xlu0 %v280, 9
        %v773 = vpop.permute.xlu0 %772
        %774 = vrot.lane.b32.xlu0 %v281, 9
        %v775 = vpop.permute.xlu0 %774
        %776 = vrot.lane.b32.xlu0 %v283, 9
        %v777 = vpop.permute.xlu0 %776
        %778 = vrot.lane.b32.xlu0 %v284, 9
        %v779 = vpop.permute.xlu0 %778
        %780 = vrot.lane.b32.xlu0 %v286, 9
        %v781 = vpop.permute.xlu0 %780
        %782 = vrot.lane.b32.xlu0 %v287, 9
        %v783 = vpop.permute.xlu0 %782
        %816 = vrot.lane.b32.xlu0 %v348, 12
        %v817 = vpop.permute.xlu0 %816
        %818 = vrot.lane.b32.xlu0 %v350, 12
        %v819 = vpop.permute.xlu0 %818
        %820 = vrot.lane.b32.xlu0 %v353, 12
        %v821 = vpop.permute.xlu0 %820
        %822 = vrot.lane.b32.xlu0 %v355, 12
        %v823 = vpop.permute.xlu0 %822
        %824 = vrot.lane.b32.xlu0 %v358, 12
        %v825 = vpop.permute.xlu0 %824
        %826 = vrot.lane.b32.xlu0 %v360, 12
        %v827 = vpop.permute.xlu0 %826
        %828 = vrot.lane.b32.xlu0 %v363, 12
        %v829 = vpop.permute.xlu0 %828
        %830 = vrot.lane.b32.xlu0 %v365, 12
        %v831 = vpop.permute.xlu0 %830
        %832 = vrot.lane.b32.xlu0 %v368, 12
        %v833 = vpop.permute.xlu0 %832
        %834 = vrot.lane.b32.xlu0 %v370, 12
        %v835 = vpop.permute.xlu0 %834
        %836 = vrot.lane.b32.xlu0 %v373, 12
        %v837 = vpop.permute.xlu0 %836
        %838 = vrot.lane.b32.xlu0 %v375, 12
        %v839 = vpop.permute.xlu0 %838
        %840 = vrot.lane.b32.xlu0 %v378, 12
        %v841 = vpop.permute.xlu0 %840
        %842 = vrot.lane.b32.xlu0 %v380, 12
        %v843 = vpop.permute.xlu0 %842
        %844 = vrot.lane.b32.xlu0 %v383, 12
        %v845 = vpop.permute.xlu0 %844
        %846 = vrot.lane.b32.xlu0 %v385, 12
        %v847 = vpop.permute.xlu0 %846
        %848 = vrot.lane.b32.xlu0 %v388, 12
        %v849 = vpop.permute.xlu0 %848
        %850 = vrot.lane.b32.xlu0 %v390, 12
        %v851 = vpop.permute.xlu0 %850
        %852 = vrot.lane.b32.xlu0 %v393, 12
        %v853 = vpop.permute.xlu0 %852
        %854 = vrot.lane.b32.xlu0 %v395, 12
        %v855 = vpop.permute.xlu0 %854
        %856 = vrot.lane.b32.xlu0 %v398, 12
        %v857 = vpop.permute.xlu0 %856
        %858 = vrot.lane.b32.xlu0 %v400, 12
        %v859 = vpop.permute.xlu0 %858
        %860 = vrot.lane.b32.xlu0 %v403, 12
        %v861 = vpop.permute.xlu0 %860
        %862 = vrot.lane.b32.xlu0 %v405, 12
        %v863 = vpop.permute.xlu0 %862
        %864 = vrot.lane.b32.xlu0 %v408, 12
        %v865 = vpop.permute.xlu0 %864
        %866 = vrot.lane.b32.xlu0 %v410, 12
        %v867 = vpop.permute.xlu0 %866
        %868 = vrot.lane.b32.xlu0 %v413, 12
        %v869 = vpop.permute.xlu0 %868
        %870 = vrot.lane.b32.xlu0 %v415, 12
        %v871 = vpop.permute.xlu0 %870
        %872 = vrot.lane.b32.xlu0 %v418, 12
        %v873 = vpop.permute.xlu0 %872
        %874 = vrot.lane.b32.xlu0 %v420, 12
        %v875 = vpop.permute.xlu0 %874
        %876 = vrot.lane.b32.xlu0 %v507, 12
        %v877 = vpop.permute.xlu0 %876
        %878 = vrot.lane.b32.xlu0 %v509, 12
        %v879 = vpop.permute.xlu0 %878
        %912 = vrot.lane.b32.xlu0 %v429, 15
        %v913 = vpop.permute.xlu0 %912
        %914 = vrot.lane.b32.xlu0 %v431, 15
        %v915 = vpop.permute.xlu0 %914
        %916 = vrot.lane.b32.xlu0 %v434, 15
        %v917 = vpop.permute.xlu0 %916
        %918 = vrot.lane.b32.xlu0 %v436, 15
        %v919 = vpop.permute.xlu0 %918
        %920 = vrot.lane.b32.xlu0 %v439, 15
        %v921 = vpop.permute.xlu0 %920
        %922 = vrot.lane.b32.xlu0 %v441, 15
        %v923 = vpop.permute.xlu0 %922
        %924 = vrot.lane.b32.xlu0 %v444, 15
        %v925 = vpop.permute.xlu0 %924
        %926 = vrot.lane.b32.xlu0 %v446, 15
        %v927 = vpop.permute.xlu0 %926
        %928 = vrot.lane.b32.xlu0 %v449, 15
        %v929 = vpop.permute.xlu0 %928
        %930 = vrot.lane.b32.xlu0 %v451, 15
        %v931 = vpop.permute.xlu0 %930
        %932 = vrot.lane.b32.xlu0 %v454, 15
        %v933 = vpop.permute.xlu0 %932
        %934 = vrot.lane.b32.xlu0 %v456, 15
        %v935 = vpop.permute.xlu0 %934
        %936 = vrot.lane.b32.xlu0 %v459, 15
        %v937 = vpop.permute.xlu0 %936
        %938 = vrot.lane.b32.xlu0 %v461, 15
        %v939 = vpop.permute.xlu0 %938
        %940 = vrot.lane.b32.xlu0 %v464, 15
        %v941 = vpop.permute.xlu0 %940
        %942 = vrot.lane.b32.xlu0 %v466, 15
        %v943 = vpop.permute.xlu0 %942
        %944 = vrot.lane.b32.xlu0 %v469, 15
        %v945 = vpop.permute.xlu0 %944
        %946 = vrot.lane.b32.xlu0 %v471, 15
        %v947 = vpop.permute.xlu0 %946
        %948 = vrot.lane.b32.xlu0 %v474, 15
        %v949 = vpop.permute.xlu0 %948
        %950 = vrot.lane.b32.xlu0 %v476, 15
        %v951 = vpop.permute.xlu0 %950
        %952 = vrot.lane.b32.xlu0 %v479, 15
        %v953 = vpop.permute.xlu0 %952
        %954 = vrot.lane.b32.xlu0 %v481, 15
        %v955 = vpop.permute.xlu0 %954
        %956 = vrot.lane.b32.xlu0 %v484, 15
        %v957 = vpop.permute.xlu0 %956
        %958 = vrot.lane.b32.xlu0 %v486, 15
        %v959 = vpop.permute.xlu0 %958
        %960 = vrot.lane.b32.xlu0 %v489, 15
        %v961 = vpop.permute.xlu0 %960
        %962 = vrot.lane.b32.xlu0 %v491, 15
        %v963 = vpop.permute.xlu0 %962
        %964 = vrot.lane.b32.xlu0 %v494, 15
        %v965 = vpop.permute.xlu0 %964
        %966 = vrot.lane.b32.xlu0 %v496, 15
        %v967 = vpop.permute.xlu0 %966
        %968 = vrot.lane.b32.xlu0 %v499, 15
        %v969 = vpop.permute.xlu0 %968
        %970 = vrot.lane.b32.xlu0 %v501, 15
        %v971 = vpop.permute.xlu0 %970
        %972 = vrot.lane.b32.xlu0 %v512, 15
        %v973 = vpop.permute.xlu0 %972
        %974 = vrot.lane.b32.xlu0 %v514, 15
        %v975 = vpop.permute.xlu0 %974
        %1008 = vrot.lane.b32.xlu0 %v244, 18
        %v1009 = vpop.permute.xlu0 %1008
        %1010 = vrot.lane.b32.xlu0 %v245, 18
        %v1011 = vpop.permute.xlu0 %1010
        %1012 = vrot.lane.b32.xlu0 %v247, 18
        %v1013 = vpop.permute.xlu0 %1012
        %1014 = vrot.lane.b32.xlu0 %v248, 18
        %v1015 = vpop.permute.xlu0 %1014
        %1016 = vrot.lane.b32.xlu0 %v250, 18
        %v1017 = vpop.permute.xlu0 %1016
        %1018 = vrot.lane.b32.xlu0 %v251, 18
        %v1019 = vpop.permute.xlu0 %1018
        %1020 = vrot.lane.b32.xlu0 %v253, 18
        %v1021 = vpop.permute.xlu0 %1020
        %1022 = vrot.lane.b32.xlu0 %v254, 18
        %v1023 = vpop.permute.xlu0 %1022
        %1024 = vrot.lane.b32.xlu0 %v256, 18
        %v1025 = vpop.permute.xlu0 %1024
        %1026 = vrot.lane.b32.xlu0 %v257, 18
        %v1027 = vpop.permute.xlu0 %1026
        %1028 = vrot.lane.b32.xlu0 %v259, 18
        %v1029 = vpop.permute.xlu0 %1028
        %1030 = vrot.lane.b32.xlu0 %v260, 18
        %v1031 = vpop.permute.xlu0 %1030
        %1032 = vrot.lane.b32.xlu0 %v262, 18
        %v1033 = vpop.permute.xlu0 %1032
        %1034 = vrot.lane.b32.xlu0 %v263, 18
        %v1035 = vpop.permute.xlu0 %1034
        %1036 = vrot.lane.b32.xlu0 %v265, 18
        %v1037 = vpop.permute.xlu0 %1036
        %1038 = vrot.lane.b32.xlu0 %v266, 18
        %v1039 = vpop.permute.xlu0 %1038
        %1040 = vrot.lane.b32.xlu0 %v268, 18
        %v1041 = vpop.permute.xlu0 %1040
        %1042 = vrot.lane.b32.xlu0 %v269, 18
        %v1043 = vpop.permute.xlu0 %1042
        %1044 = vrot.lane.b32.xlu0 %v271, 18
        %v1045 = vpop.permute.xlu0 %1044
        %1046 = vrot.lane.b32.xlu0 %v272, 18
        %v1047 = vpop.permute.xlu0 %1046
        %1048 = vrot.lane.b32.xlu0 %v274, 18
        %v1049 = vpop.permute.xlu0 %1048
        %1050 = vrot.lane.b32.xlu0 %v275, 18
        %v1051 = vpop.permute.xlu0 %1050
        %1052 = vrot.lane.b32.xlu0 %v277, 18
        %v1053 = vpop.permute.xlu0 %1052
        %1054 = vrot.lane.b32.xlu0 %v278, 18
        %v1055 = vpop.permute.xlu0 %1054
        %1056 = vrot.lane.b32.xlu0 %v280, 18
        %v1057 = vpop.permute.xlu0 %1056
        %1058 = vrot.lane.b32.xlu0 %v281, 18
        %v1059 = vpop.permute.xlu0 %1058
        %1060 = vrot.lane.b32.xlu0 %v283, 18
        %v1061 = vpop.permute.xlu0 %1060
        %1062 = vrot.lane.b32.xlu0 %v284, 18
        %v1063 = vpop.permute.xlu0 %1062
        %1064 = vrot.lane.b32.xlu0 %v286, 18
        %v1065 = vpop.permute.xlu0 %1064
        %1066 = vrot.lane.b32.xlu0 %v287, 18
        %v1067 = vpop.permute.xlu0 %1066
        %1068 = vrot.lane.b32.xlu0 %v289, 18
        %v1069 = vpop.permute.xlu0 %1068
        %1070 = vrot.lane.b32.xlu0 %v290, 18
        %v1071 = vpop.permute.xlu0 %1070
        %1104 = vrot.lane.b32.xlu0 %v353, 21
        %v1105 = vpop.permute.xlu0 %1104
        %1106 = vrot.lane.b32.xlu0 %v355, 21
        %v1107 = vpop.permute.xlu0 %1106
        %1108 = vrot.lane.b32.xlu0 %v358, 21
        %v1109 = vpop.permute.xlu0 %1108
        %1110 = vrot.lane.b32.xlu0 %v360, 21
        %v1111 = vpop.permute.xlu0 %1110
        %1112 = vrot.lane.b32.xlu0 %v363, 21
        %v1113 = vpop.permute.xlu0 %1112
        %1114 = vrot.lane.b32.xlu0 %v365, 21
        %v1115 = vpop.permute.xlu0 %1114
        %1116 = vrot.lane.b32.xlu0 %v368, 21
        %v1117 = vpop.permute.xlu0 %1116
        %1118 = vrot.lane.b32.xlu0 %v370, 21
        %v1119 = vpop.permute.xlu0 %1118
        %1120 = vrot.lane.b32.xlu0 %v373, 21
        %v1121 = vpop.permute.xlu0 %1120
        %1122 = vrot.lane.b32.xlu0 %v375, 21
        %v1123 = vpop.permute.xlu0 %1122
        %1124 = vrot.lane.b32.xlu0 %v378, 21
        %v1125 = vpop.permute.xlu0 %1124
        %1126 = vrot.lane.b32.xlu0 %v380, 21
        %v1127 = vpop.permute.xlu0 %1126
        %1128 = vrot.lane.b32.xlu0 %v383, 21
        %v1129 = vpop.permute.xlu0 %1128
        %1130 = vrot.lane.b32.xlu0 %v385, 21
        %v1131 = vpop.permute.xlu0 %1130
        %1132 = vrot.lane.b32.xlu0 %v388, 21
        %v1133 = vpop.permute.xlu0 %1132
        %1134 = vrot.lane.b32.xlu0 %v390, 21
        %v1135 = vpop.permute.xlu0 %1134
        %1136 = vrot.lane.b32.xlu0 %v393, 21
        %v1137 = vpop.permute.xlu0 %1136
        %1138 = vrot.lane.b32.xlu0 %v395, 21
        %v1139 = vpop.permute.xlu0 %1138
        %1140 = vrot.lane.b32.xlu0 %v398, 21
        %v1141 = vpop.permute.xlu0 %1140
        %1142 = vrot.lane.b32.xlu0 %v400, 21
        %v1143 = vpop.permute.xlu0 %1142
        %1144 = vrot.lane.b32.xlu0 %v403, 21
        %v1145 = vpop.permute.xlu0 %1144
        %1146 = vrot.lane.b32.xlu0 %v405, 21
        %v1147 = vpop.permute.xlu0 %1146
        %1148 = vrot.lane.b32.xlu0 %v408, 21
        %v1149 = vpop.permute.xlu0 %1148
        %1150 = vrot.lane.b32.xlu0 %v410, 21
        %v1151 = vpop.permute.xlu0 %1150
        %1152 = vrot.lane.b32.xlu0 %v413, 21
        %v1153 = vpop.permute.xlu0 %1152
        %1154 = vrot.lane.b32.xlu0 %v415, 21
        %v1155 = vpop.permute.xlu0 %1154
        %1156 = vrot.lane.b32.xlu0 %v418, 21
        %v1157 = vpop.permute.xlu0 %1156
        %1158 = vrot.lane.b32.xlu0 %v420, 21
        %v1159 = vpop.permute.xlu0 %1158
        %1160 = vrot.lane.b32.xlu0 %v507, 21
        %v1161 = vpop.permute.xlu0 %1160
        %1162 = vrot.lane.b32.xlu0 %v509, 21
        %v1163 = vpop.permute.xlu0 %1162
        %1164 = vrot.lane.b32.xlu0 %v520, 21
        %v1165 = vpop.permute.xlu0 %1164
        %1166 = vrot.lane.b32.xlu0 %v522, 21
        %v1167 = vpop.permute.xlu0 %1166
        %1200 = vrot.lane.b32.xlu0 %v434, 24
        %v1201 = vpop.permute.xlu0 %1200
        %1202 = vrot.lane.b32.xlu0 %v436, 24
        %v1203 = vpop.permute.xlu0 %1202
        %1204 = vrot.lane.b32.xlu0 %v439, 24
        %v1205 = vpop.permute.xlu0 %1204
        %1206 = vrot.lane.b32.xlu0 %v441, 24
        %v1207 = vpop.permute.xlu0 %1206
        %1208 = vrot.lane.b32.xlu0 %v444, 24
        %v1209 = vpop.permute.xlu0 %1208
        %1210 = vrot.lane.b32.xlu0 %v446, 24
        %v1211 = vpop.permute.xlu0 %1210
        %1212 = vrot.lane.b32.xlu0 %v449, 24
        %v1213 = vpop.permute.xlu0 %1212
        %1214 = vrot.lane.b32.xlu0 %v451, 24
        %v1215 = vpop.permute.xlu0 %1214
        %1216 = vrot.lane.b32.xlu0 %v454, 24
        %v1217 = vpop.permute.xlu0 %1216
        %1218 = vrot.lane.b32.xlu0 %v456, 24
        %v1219 = vpop.permute.xlu0 %1218
        %1220 = vrot.lane.b32.xlu0 %v459, 24
        %v1221 = vpop.permute.xlu0 %1220
        %1222 = vrot.lane.b32.xlu0 %v461, 24
        %v1223 = vpop.permute.xlu0 %1222
        %1224 = vrot.lane.b32.xlu0 %v464, 24
        %v1225 = vpop.permute.xlu0 %1224
        %1226 = vrot.lane.b32.xlu0 %v466, 24
        %v1227 = vpop.permute.xlu0 %1226
        %1228 = vrot.lane.b32.xlu0 %v469, 24
        %v1229 = vpop.permute.xlu0 %1228
        %1230 = vrot.lane.b32.xlu0 %v471, 24
        %v1231 = vpop.permute.xlu0 %1230
        %1232 = vrot.lane.b32.xlu0 %v474, 24
        %v1233 = vpop.permute.xlu0 %1232
        %1234 = vrot.lane.b32.xlu0 %v476, 24
        %v1235 = vpop.permute.xlu0 %1234
        %1236 = vrot.lane.b32.xlu0 %v479, 24
        %v1237 = vpop.permute.xlu0 %1236
        %1238 = vrot.lane.b32.xlu0 %v481, 24
        %v1239 = vpop.permute.xlu0 %1238
        %1240 = vrot.lane.b32.xlu0 %v484, 24
        %v1241 = vpop.permute.xlu0 %1240
        %1242 = vrot.lane.b32.xlu0 %v486, 24
        %v1243 = vpop.permute.xlu0 %1242
        %1244 = vrot.lane.b32.xlu0 %v489, 24
        %v1245 = vpop.permute.xlu0 %1244
        %1246 = vrot.lane.b32.xlu0 %v491, 24
        %v1247 = vpop.permute.xlu0 %1246
        %1248 = vrot.lane.b32.xlu0 %v494, 24
        %v1249 = vpop.permute.xlu0 %1248
        %1250 = vrot.lane.b32.xlu0 %v496, 24
        %v1251 = vpop.permute.xlu0 %1250
        %1252 = vrot.lane.b32.xlu0 %v499, 24
        %v1253 = vpop.permute.xlu0 %1252
        %1254 = vrot.lane.b32.xlu0 %v501, 24
        %v1255 = vpop.permute.xlu0 %1254
        %1256 = vrot.lane.b32.xlu0 %v512, 24
        %v1257 = vpop.permute.xlu0 %1256
        %1258 = vrot.lane.b32.xlu0 %v514, 24
        %v1259 = vpop.permute.xlu0 %1258
        %1260 = vrot.lane.b32.xlu0 %v525, 24
        %v1261 = vpop.permute.xlu0 %1260
        %1262 = vrot.lane.b32.xlu0 %v527, 24
        %v1263 = vpop.permute.xlu0 %1262
        %vm1296 = vcmask 23552
        %v1297 = vsel %vm1296, %v238, %v529
        %v1298 = vsel %vm1296, %v239, %v531
        %v1299 = vsel %vm1296, %v241, %v533
        %v1300 = vsel %vm1296, %v242, %v535
        %v1301 = vsel %vm1296, %v244, %v537
        %v1302 = vsel %vm1296, %v245, %v539
        %v1303 = vsel %vm1296, %v247, %v541
        %v1304 = vsel %vm1296, %v248, %v543
        %v1305 = vsel %vm1296, %v250, %v545
        %v1306 = vsel %vm1296, %v251, %v547
        %v1307 = vsel %vm1296, %v253, %v549
        %v1308 = vsel %vm1296, %v254, %v551
        %v1309 = vsel %vm1296, %v256, %v553
        %v1310 = vsel %vm1296, %v257, %v555
        %v1311 = vsel %vm1296, %v259, %v557
        %v1312 = vsel %vm1296, %v260, %v559
        %v1313 = vsel %vm1296, %v262, %v561
        %v1314 = vsel %vm1296, %v263, %v563
        %v1315 = vsel %vm1296, %v265, %v565
        %v1316 = vsel %vm1296, %v266, %v567
        %v1317 = vsel %vm1296, %v268, %v569
        %v1318 = vsel %vm1296, %v269, %v571
        %v1319 = vsel %vm1296, %v271, %v573
        %v1320 = vsel %vm1296, %v272, %v575
        %v1321 = vsel %vm1296, %v274, %v577
        %v1322 = vsel %vm1296, %v275, %v579
        %v1323 = vsel %vm1296, %v277, %v581
        %v1324 = vsel %vm1296, %v278, %v583
        %v1325 = vsel %vm1296, %v280, %v585
        %v1326 = vsel %vm1296, %v281, %v587
        %v1327 = vsel %vm1296, %v283, %v589
        %v1328 = vsel %vm1296, %v284, %v591
        %vm1329 = vcmask 48128
        %v1330 = vsel %vm1329, %v1297, %v625
        %v1331 = vsel %vm1329, %v1298, %v627
        %v1332 = vsel %vm1329, %v1299, %v629
        %v1333 = vsel %vm1329, %v1300, %v631
        %v1334 = vsel %vm1329, %v1301, %v633
        %v1335 = vsel %vm1329, %v1302, %v635
        %v1336 = vsel %vm1329, %v1303, %v637
        %v1337 = vsel %vm1329, %v1304, %v639
        %v1338 = vsel %vm1329, %v1305, %v641
        %v1339 = vsel %vm1329, %v1306, %v643
        %v1340 = vsel %vm1329, %v1307, %v645
        %v1341 = vsel %vm1329, %v1308, %v647
        %v1342 = vsel %vm1329, %v1309, %v649
        %v1343 = vsel %vm1329, %v1310, %v651
        %v1344 = vsel %vm1329, %v1311, %v653
        %v1345 = vsel %vm1329, %v1312, %v655
        %v1346 = vsel %vm1329, %v1313, %v657
        %v1347 = vsel %vm1329, %v1314, %v659
        %v1348 = vsel %vm1329, %v1315, %v661
        %v1349 = vsel %vm1329, %v1316, %v663
        %v1350 = vsel %vm1329, %v1317, %v665
        %v1351 = vsel %vm1329, %v1318, %v667
        %v1352 = vsel %vm1329, %v1319, %v669
        %v1353 = vsel %vm1329, %v1320, %v671
        %v1354 = vsel %vm1329, %v1321, %v673
        %v1355 = vsel %vm1329, %v1322, %v675
        %v1356 = vsel %vm1329, %v1323, %v677
        %v1357 = vsel %vm1329, %v1324, %v679
        %v1358 = vsel %vm1329, %v1325, %v681
        %v1359 = vsel %vm1329, %v1326, %v683
        %v1360 = vsel %vm1329, %v1327, %v685
        %v1361 = vsel %vm1329, %v1328, %v687
        %vm1362 = vcmask 72704
        %v1363 = vsel %vm1362, %v1330, %v721
        %v1364 = vsel %vm1362, %v1331, %v723
        %v1365 = vsel %vm1362, %v1332, %v725
        %v1366 = vsel %vm1362, %v1333, %v727
        %v1367 = vsel %vm1362, %v1334, %v729
        %v1368 = vsel %vm1362, %v1335, %v731
        %v1369 = vsel %vm1362, %v1336, %v733
        %v1370 = vsel %vm1362, %v1337, %v735
        %v1371 = vsel %vm1362, %v1338, %v737
        %v1372 = vsel %vm1362, %v1339, %v739
        %v1373 = vsel %vm1362, %v1340, %v741
        %v1374 = vsel %vm1362, %v1341, %v743
        %v1375 = vsel %vm1362, %v1342, %v745
        %v1376 = vsel %vm1362, %v1343, %v747
        %v1377 = vsel %vm1362, %v1344, %v749
        %v1378 = vsel %vm1362, %v1345, %v751
        %v1379 = vsel %vm1362, %v1346, %v753
        %v1380 = vsel %vm1362, %v1347, %v755
        %v1381 = vsel %vm1362, %v1348, %v757
        %v1382 = vsel %vm1362, %v1349, %v759
        %v1383 = vsel %vm1362, %v1350, %v761
        %v1384 = vsel %vm1362, %v1351, %v763
        %v1385 = vsel %vm1362, %v1352, %v765
        %v1386 = vsel %vm1362, %v1353, %v767
        %v1387 = vsel %vm1362, %v1354, %v769
        %v1388 = vsel %vm1362, %v1355, %v771
        %v1389 = vsel %vm1362, %v1356, %v773
        %v1390 = vsel %vm1362, %v1357, %v775
        %v1391 = vsel %vm1362, %v1358, %v777
        %v1392 = vsel %vm1362, %v1359, %v779
        %v1393 = vsel %vm1362, %v1360, %v781
        %v1394 = vsel %vm1362, %v1361, %v783
        %vm1395 = vcmask 97280
        %v1396 = vsel %vm1395, %v1363, %v817
        %v1397 = vsel %vm1395, %v1364, %v819
        %v1398 = vsel %vm1395, %v1365, %v821
        %v1399 = vsel %vm1395, %v1366, %v823
        %v1400 = vsel %vm1395, %v1367, %v825
        %v1401 = vsel %vm1395, %v1368, %v827
        %v1402 = vsel %vm1395, %v1369, %v829
        %v1403 = vsel %vm1395, %v1370, %v831
        %v1404 = vsel %vm1395, %v1371, %v833
        %v1405 = vsel %vm1395, %v1372, %v835
        %v1406 = vsel %vm1395, %v1373, %v837
        %v1407 = vsel %vm1395, %v1374, %v839
        %v1408 = vsel %vm1395, %v1375, %v841
        %v1409 = vsel %vm1395, %v1376, %v843
        %v1410 = vsel %vm1395, %v1377, %v845
        %v1411 = vsel %vm1395, %v1378, %v847
        %v1412 = vsel %vm1395, %v1379, %v849
        %v1413 = vsel %vm1395, %v1380, %v851
        %v1414 = vsel %vm1395, %v1381, %v853
        %v1415 = vsel %vm1395, %v1382, %v855
        %v1416 = vsel %vm1395, %v1383, %v857
        %v1417 = vsel %vm1395, %v1384, %v859
        %v1418 = vsel %vm1395, %v1385, %v861
        %v1419 = vsel %vm1395, %v1386, %v863
        %v1420 = vsel %vm1395, %v1387, %v865
        %v1421 = vsel %vm1395, %v1388, %v867
        %v1422 = vsel %vm1395, %v1389, %v869
        %v1423 = vsel %vm1395, %v1390, %v871
        %v1424 = vsel %vm1395, %v1391, %v873
        %v1425 = vsel %vm1395, %v1392, %v875
        %v1426 = vsel %vm1395, %v1393, %v877
        %v1427 = vsel %vm1395, %v1394, %v879
        %vm1428 = vcmask 121856
        %v1429 = vsel %vm1428, %v1396, %v913
        %v1430 = vsel %vm1428, %v1397, %v915
        %v1431 = vsel %vm1428, %v1398, %v917
        %v1432 = vsel %vm1428, %v1399, %v919
        %v1433 = vsel %vm1428, %v1400, %v921
        %v1434 = vsel %vm1428, %v1401, %v923
        %v1435 = vsel %vm1428, %v1402, %v925
        %v1436 = vsel %vm1428, %v1403, %v927
        %v1437 = vsel %vm1428, %v1404, %v929
        %v1438 = vsel %vm1428, %v1405, %v931
        %v1439 = vsel %vm1428, %v1406, %v933
        %v1440 = vsel %vm1428, %v1407, %v935
        %v1441 = vsel %vm1428, %v1408, %v937
        %v1442 = vsel %vm1428, %v1409, %v939
        %v1443 = vsel %vm1428, %v1410, %v941
        %v1444 = vsel %vm1428, %v1411, %v943
        %v1445 = vsel %vm1428, %v1412, %v945
        %v1446 = vsel %vm1428, %v1413, %v947
        %v1447 = vsel %vm1428, %v1414, %v949
        %v1448 = vsel %vm1428, %v1415, %v951
        %v1449 = vsel %vm1428, %v1416, %v953
        %v1450 = vsel %vm1428, %v1417, %v955
        %v1451 = vsel %vm1428, %v1418, %v957
        %v1452 = vsel %vm1428, %v1419, %v959
        %v1453 = vsel %vm1428, %v1420, %v961
        %v1454 = vsel %vm1428, %v1421, %v963
        %v1455 = vsel %vm1428, %v1422, %v965
        %v1456 = vsel %vm1428, %v1423, %v967
        %v1457 = vsel %vm1428, %v1424, %v969
        %v1458 = vsel %vm1428, %v1425, %v971
        %v1459 = vsel %vm1428, %v1426, %v973
        %v1460 = vsel %vm1428, %v1427, %v975
        %vm1461 = vcmask 146432
        %v1462 = vsel %vm1461, %v1429, %v1009
        %v1463 = vsel %vm1461, %v1430, %v1011
        %v1464 = vsel %vm1461, %v1431, %v1013
        %v1465 = vsel %vm1461, %v1432, %v1015
        %v1466 = vsel %vm1461, %v1433, %v1017
        %v1467 = vsel %vm1461, %v1434, %v1019
        %v1468 = vsel %vm1461, %v1435, %v1021
        %v1469 = vsel %vm1461, %v1436, %v1023
        %v1470 = vsel %vm1461, %v1437, %v1025
        %v1471 = vsel %vm1461, %v1438, %v1027
        %v1472 = vsel %vm1461, %v1439, %v1029
        %v1473 = vsel %vm1461, %v1440, %v1031
        %v1474 = vsel %vm1461, %v1441, %v1033
        %v1475 = vsel %vm1461, %v1442, %v1035
        %v1476 = vsel %vm1461, %v1443, %v1037
        %v1477 = vsel %vm1461, %v1444, %v1039
        %v1478 = vsel %vm1461, %v1445, %v1041
        %v1479 = vsel %vm1461, %v1446, %v1043
        %v1480 = vsel %vm1461, %v1447, %v1045
        %v1481 = vsel %vm1461, %v1448, %v1047
        %v1482 = vsel %vm1461, %v1449, %v1049
        %v1483 = vsel %vm1461, %v1450, %v1051
        %v1484 = vsel %vm1461, %v1451, %v1053
        %v1485 = vsel %vm1461, %v1452, %v1055
        %v1486 = vsel %vm1461, %v1453, %v1057
        %v1487 = vsel %vm1461, %v1454, %v1059
        %v1488 = vsel %vm1461, %v1455, %v1061
        %v1489 = vsel %vm1461, %v1456, %v1063
        %v1490 = vsel %vm1461, %v1457, %v1065
        %v1491 = vsel %vm1461, %v1458, %v1067
        %v1492 = vsel %vm1461, %v1459, %v1069
        %v1493 = vsel %vm1461, %v1460, %v1071
        %vm1494 = vcmask 171008
        %v1495 = vsel %vm1494, %v1462, %v1105
        %v1496 = vsel %vm1494, %v1463, %v1107
        %v1497 = vsel %vm1494, %v1464, %v1109
        %v1498 = vsel %vm1494, %v1465, %v1111
        %v1499 = vsel %vm1494, %v1466, %v1113
        %v1500 = vsel %vm1494, %v1467, %v1115
        %v1501 = vsel %vm1494, %v1468, %v1117
        %v1502 = vsel %vm1494, %v1469, %v1119
        %v1503 = vsel %vm1494, %v1470, %v1121
        %v1504 = vsel %vm1494, %v1471, %v1123
        %v1505 = vsel %vm1494, %v1472, %v1125
        %v1506 = vsel %vm1494, %v1473, %v1127
        %v1507 = vsel %vm1494, %v1474, %v1129
        %v1508 = vsel %vm1494, %v1475, %v1131
        %v1509 = vsel %vm1494, %v1476, %v1133
        %v1510 = vsel %vm1494, %v1477, %v1135
        %v1511 = vsel %vm1494, %v1478, %v1137
        %v1512 = vsel %vm1494, %v1479, %v1139
        %v1513 = vsel %vm1494, %v1480, %v1141
        %v1514 = vsel %vm1494, %v1481, %v1143
        %v1515 = vsel %vm1494, %v1482, %v1145
        %v1516 = vsel %vm1494, %v1483, %v1147
        %v1517 = vsel %vm1494, %v1484, %v1149
        %v1518 = vsel %vm1494, %v1485, %v1151
        %v1519 = vsel %vm1494, %v1486, %v1153
        %v1520 = vsel %vm1494, %v1487, %v1155
        %v1521 = vsel %vm1494, %v1488, %v1157
        %v1522 = vsel %vm1494, %v1489, %v1159
        %v1523 = vsel %vm1494, %v1490, %v1161
        %v1524 = vsel %vm1494, %v1491, %v1163
        %v1525 = vsel %vm1494, %v1492, %v1165
        %v1526 = vsel %vm1494, %v1493, %v1167
        %vm1527 = vcmask 195584
        %v1528 = vsel %vm1527, %v1495, %v1201
        %v1529 = vsel %vm1527, %v1496, %v1203
        %v1530 = vsel %vm1527, %v1497, %v1205
        %v1531 = vsel %vm1527, %v1498, %v1207
        %v1532 = vsel %vm1527, %v1499, %v1209
        %v1533 = vsel %vm1527, %v1500, %v1211
        %v1534 = vsel %vm1527, %v1501, %v1213
        %v1535 = vsel %vm1527, %v1502, %v1215
        %v1536 = vsel %vm1527, %v1503, %v1217
        %v1537 = vsel %vm1527, %v1504, %v1219
        %v1538 = vsel %vm1527, %v1505, %v1221
        %v1539 = vsel %vm1527, %v1506, %v1223
        %v1540 = vsel %vm1527, %v1507, %v1225
        %v1541 = vsel %vm1527, %v1508, %v1227
        %v1542 = vsel %vm1527, %v1509, %v1229
        %v1543 = vsel %vm1527, %v1510, %v1231
        %v1544 = vsel %vm1527, %v1511, %v1233
        %v1545 = vsel %vm1527, %v1512, %v1235
        %v1546 = vsel %vm1527, %v1513, %v1237
        %v1547 = vsel %vm1527, %v1514, %v1239
        %v1548 = vsel %vm1527, %v1515, %v1241
        %v1549 = vsel %vm1527, %v1516, %v1243
        %v1550 = vsel %vm1527, %v1517, %v1245
        %v1551 = vsel %vm1527, %v1518, %v1247
        %v1552 = vsel %vm1527, %v1519, %v1249
        %v1553 = vsel %vm1527, %v1520, %v1251
        %v1554 = vsel %vm1527, %v1521, %v1253
        %v1555 = vsel %vm1527, %v1522, %v1255
        %v1556 = vsel %vm1527, %v1523, %v1257
        %v1557 = vsel %vm1527, %v1524, %v1259
        %v1558 = vsel %vm1527, %v1525, %v1261
        %v1559 = vsel %vm1527, %v1526, %v1263
        %v1560 = vld [vmem:[%s233] sm:$0xff]
        %v1561 = vld [vmem:[%s233 + $0x8] sm:$0xff]
        %v1562 = vld [vmem:[%s233 + $0x10] sm:$0xff]
        %v1563 = vld [vmem:[%s233 + $0x18] sm:$0x7]
        %v1564 = vld [vmem:[%s236] sm:$0x1]
        %v1566 = vlaneseq
        %v1567 = vshrl.u32 %v1566, 7
        %v1568 = vsub.s32 0, %v1567
        %v1569 = vrot.slane %v1564, %v1568
        %vm1571 = vcmask 220160
        %v1573 = vsel %vm1571, %v1528, 0
        %v1576 = vsel %vm1571, %v1529, 0
        %v1579 = vsel %vm1571, %v1530, 0
        %v1582 = vsel %vm1571, %v1531, 0
        %v1585 = vsel %vm1571, %v1532, 0
        %v1588 = vsel %vm1571, %v1533, 0
        %v1591 = vsel %vm1571, %v1534, 0
        %v1594 = vsel %vm1571, %v1535, 0
        %v1597 = vsel %vm1571, %v1536, 0
        %v1600 = vsel %vm1571, %v1537, 0
        %v1603 = vsel %vm1571, %v1538, 0
        %v1606 = vsel %vm1571, %v1539, 0
        %v1609 = vsel %vm1571, %v1540, 0
        %v1612 = vsel %vm1571, %v1541, 0
        %v1615 = vsel %vm1571, %v1542, 0
        %v1618 = vsel %vm1571, %v1543, 0
        %v1621 = vsel %vm1571, %v1544, 0
        %v1624 = vsel %vm1571, %v1545, 0
        %v1627 = vsel %vm1571, %v1546, 0
        %v1630 = vsel %vm1571, %v1547, 0
        %v1633 = vsel %vm1571, %v1548, 0
        %v1636 = vsel %vm1571, %v1549, 0
        %v1639 = vsel %vm1571, %v1550, 0
        %v1642 = vsel %vm1571, %v1551, 0
        %v1645 = vsel %vm1571, %v1552, 0
        %v1648 = vsel %vm1571, %v1553, 0
        %v1651 = vsel %vm1571, %v1554, 0
        %v1654 = vsel %vm1571, %v1555, 0
        %v1657 = vsel %vm1571, %v1556, 0
        %v1660 = vsel %vm1571, %v1557, 0
        %v1663 = vsel %vm1571, %v1558, 0
        %v1666 = vsel %vm1571, %v1559, 0
        %vm1668 = vcmask 1042432
        %v1670 = vsel %vm1668, %v1563, 0
        %1672 = vmatprep.subr.mxu0 0.0
        %1673 = vmatpush1.msra.mxu0 %v1560
        %1674 = vmatprep.subr.mxu0 0.0
        %1675 = vmatpush1.msra.mxu0 %v1561
        %1676 = vmatprep.subr.mxu0 0.0
        %1677 = vmatpush1.msra.mxu0 %v1562
        %1678 = vmatprep.subr.mxu0 0.0
        %1679 = vmatpush1.msra.mxu0 %v1670
        %1680 = vmatprep.subr.mxu0 0.0
        %1681 = vmatpush1.msra.mxu0 0.0
        %1682 = vmatprep.subr.mxu0 0.0
        %1683 = vmatpush1.msra.mxu0 0.0
        %1684 = vmatprep.subr.mxu0 0.0
        %1685 = vmatpush1.msra.mxu0 0.0
        %1686 = vmatprep.subr.mxu0 0.0
        %1687 = vmatpush1.msra.mxu0 0.0
        %1688 = vmatprep.subr.mxu0 0.0
        %1689 = vmatpush1.msra.mxu0 0.0
        %1690 = vmatprep.subr.mxu0 0.0
        %1691 = vmatpush1.msra.mxu0 0.0
        %1692 = vmatprep.subr.mxu0 0.0
        %1693 = vmatpush1.msra.mxu0 0.0
        %1694 = vmatprep.subr.mxu0 0.0
        %1695 = vmatpush1.msra.mxu0 0.0
        %1696 = vmatprep.subr.mxu0 0.0
        %1697 = vmatpush1.msra.mxu0 0.0
        %1698 = vmatprep.subr.mxu0 0.0
        %1699 = vmatpush1.msra.mxu0 0.0
        %1700 = vmatprep.subr.mxu0 0.0
        %1701 = vmatpush1.msra.mxu0 0.0
        %1702 = vmatprep.subr.mxu0 0.0
        %1703 = vmatpush1.msra.mxu0 0.0
        %1704 = vmatprep.subr.mxu0 0.0
        %1705 = vmatpush1.msra.mxu0 0.0
        %1706 = vmatprep.subr.mxu0 0.0
        %1707 = vmatpush1.msra.mxu0 0.0
        %1708 = vmatprep.subr.mxu0 0.0
        %1709 = vmatpush1.msra.mxu0 0.0
        %1710 = vmatprep.subr.mxu0 0.0
        %1711 = vmatpush1.msra.mxu0 0.0
        %1712 = vmatprep.subr.mxu0 0.0
        %1713 = vmatpush1.msra.mxu0 0.0
        %1714 = vmatprep.subr.mxu0 0.0
        %1715 = vmatpush1.msra.mxu0 0.0
        %1716 = vmatprep.subr.mxu0 0.0
        %1717 = vmatpush1.msra.mxu0 0.0
        %1718 = vmatprep.subr.mxu0 0.0
        %1719 = vmatpush1.msra.mxu0 0.0
        %1720 = vmatprep.subr.mxu0 0.0
        %1721 = vmatpush1.msra.mxu0 0.0
        %1722 = vmatprep.subr.mxu0 0.0
        %1723 = vmatpush1.msra.mxu0 0.0
        %1724 = vmatprep.subr.mxu0 0.0
        %1725 = vmatpush1.msra.mxu0 0.0
        %1726 = vmatprep.subr.mxu0 0.0
        %1727 = vmatpush1.msra.mxu0 0.0
        %1728 = vmatprep.subr.mxu0 0.0
        %1729 = vmatpush1.msra.mxu0 0.0
        %1730 = vmatprep.subr.mxu0 0.0
        %1731 = vmatpush1.msra.mxu0 0.0
        %1732 = vmatprep.subr.mxu0 0.0
        %1733 = vmatpush1.msra.mxu0 0.0
        %1734 = vmatprep.subr.mxu0 0.0
        %1735 = vmatpush1.msra.mxu0 0.0
        %1736 = vmatprep.mubr.f32.mxu0 0.0
        %1737 = vmatmul.mubr.f32.gmra.mrb[0].mxu0 %v1573
        %v1738 = vpop.f32.mrb[0].mxu0
        %v1739 = vadd.f32 %v1569, %v1738
        %v1740 = vpop.f32.mrb[0].mxu0
        %1741 = vmatprep.mubr.f32.mxu0 0.0
        %1742 = vmatmul.mubr.f32.gmra.mrb[0].mxu0 %v1576
        %v1743 = vpop.f32.mrb[0].mxu0
        %v1744 = vadd.f32 %v1569, %v1743
        %v1745 = vpop.f32.mrb[0].mxu0
        %1746 = vmatprep.mubr.f32.mxu0 0.0
        %1747 = vmatmul.mubr.f32.gmra.mrb[0].mxu0 %v1579
        %v1748 = vpop.f32.mrb[0].mxu0
        %v1749 = vadd.f32 %v1569, %v1748
        %v1750 = vpop.f32.mrb[0].mxu0
        %1751 = vmatprep.mubr.f32.mxu0 0.0
        %1752 = vmatmul.mubr.f32.gmra.mrb[0].mxu0 %v1582
        %v1753 = vpop.f32.mrb[0].mxu0
        %v1754 = vadd.f32 %v1569, %v1753
        %v1755 = vpop.f32.mrb[0].mxu0
        %1756 = vmatprep.mubr.f32.mxu0 0.0
        %1757 = vmatmul.mubr.f32.gmra.mrb[0].mxu0 %v1585
        %v1758 = vpop.f32.mrb[0].mxu0
        %v1759 = vadd.f32 %v1569, %v1758
        %v1760 = vpop.f32.mrb[0].mxu0
        %1761 = vmatprep.mubr.f32.mxu0 0.0
        %1762 = vmatmul.mubr.f32.gmra.mrb[0].mxu0 %v1588
        %v1763 = vpop.f32.mrb[0].mxu0
        %v1764 = vadd.f32 %v1569, %v1763
        %v1765 = vpop.f32.mrb[0].mxu0
        %1766 = vmatprep.mubr.f32.mxu0 0.0
        %1767 = vmatmul.mubr.f32.gmra.mrb[0].mxu0 %v1591
        %v1768 = vpop.f32.mrb[0].mxu0
        %v1769 = vadd.f32 %v1569, %v1768
        %v1770 = vpop.f32.mrb[0].mxu0
        %1771 = vmatprep.mubr.f32.mxu0 0.0
        %1772 = vmatmul.mubr.f32.gmra.mrb[0].mxu0 %v1594
        %v1773 = vpop.f32.mrb[0].mxu0
        %v1774 = vadd.f32 %v1569, %v1773
        %v1775 = vpop.f32.mrb[0].mxu0
        %1776 = vmatprep.mubr.f32.mxu0 0.0
        %1777 = vmatmul.mubr.f32.gmra.mrb[0].mxu0 %v1597
        %v1778 = vpop.f32.mrb[0].mxu0
        %v1779 = vadd.f32 %v1569, %v1778
        %v1780 = vpop.f32.mrb[0].mxu0
        %1781 = vmatprep.mubr.f32.mxu0 0.0
        %1782 = vmatmul.mubr.f32.gmra.mrb[0].mxu0 %v1600
        %v1783 = vpop.f32.mrb[0].mxu0
        %v1784 = vadd.f32 %v1569, %v1783
        %v1785 = vpop.f32.mrb[0].mxu0
        %1786 = vmatprep.mubr.f32.mxu0 0.0
        %1787 = vmatmul.mubr.f32.gmra.mrb[0].mxu0 %v1603
        %v1788 = vpop.f32.mrb[0].mxu0
        %v1789 = vadd.f32 %v1569, %v1788
        %v1790 = vpop.f32.mrb[0].mxu0
        %1791 = vmatprep.mubr.f32.mxu0 0.0
        %1792 = vmatmul.mubr.f32.gmra.mrb[0].mxu0 %v1606
        %v1793 = vpop.f32.mrb[0].mxu0
        %v1794 = vadd.f32 %v1569, %v1793
        %v1795 = vpop.f32.mrb[0].mxu0
        %1796 = vmatprep.mubr.f32.mxu0 0.0
        %1797 = vmatmul.mubr.f32.gmra.mrb[0].mxu0 %v1609
        %v1798 = vpop.f32.mrb[0].mxu0
        %v1799 = vadd.f32 %v1569, %v1798
        %v1800 = vpop.f32.mrb[0].mxu0
        %1801 = vmatprep.mubr.f32.mxu0 0.0
        %1802 = vmatmul.mubr.f32.gmra.mrb[0].mxu0 %v1612
        %v1803 = vpop.f32.mrb[0].mxu0
        %v1804 = vadd.f32 %v1569, %v1803
        %v1805 = vpop.f32.mrb[0].mxu0
        %1806 = vmatprep.mubr.f32.mxu0 0.0
        %1807 = vmatmul.mubr.f32.gmra.mrb[0].mxu0 %v1615
        %v1808 = vpop.f32.mrb[0].mxu0
        %v1809 = vadd.f32 %v1569, %v1808
        %v1810 = vpop.f32.mrb[0].mxu0
        %1811 = vmatprep.mubr.f32.mxu0 0.0
        %1812 = vmatmul.mubr.f32.gmra.mrb[0].mxu0 %v1618
        %v1813 = vpop.f32.mrb[0].mxu0
        %v1814 = vadd.f32 %v1569, %v1813
        %v1815 = vpop.f32.mrb[0].mxu0
        %1816 = vmatprep.mubr.f32.mxu0 0.0
        %1817 = vmatmul.mubr.f32.gmra.mrb[0].mxu0 %v1621
        %v1818 = vpop.f32.mrb[0].mxu0
        %v1819 = vadd.f32 %v1569, %v1818
        %v1820 = vpop.f32.mrb[0].mxu0
        %1821 = vmatprep.mubr.f32.mxu0 0.0
        %1822 = vmatmul.mubr.f32.gmra.mrb[0].mxu0 %v1624
        %v1823 = vpop.f32.mrb[0].mxu0
        %v1824 = vadd.f32 %v1569, %v1823
        %v1825 = vpop.f32.mrb[0].mxu0
        %1826 = vmatprep.mubr.f32.mxu0 0.0
        %1827 = vmatmul.mubr.f32.gmra.mrb[0].mxu0 %v1627
        %v1828 = vpop.f32.mrb[0].mxu0
        %v1829 = vadd.f32 %v1569, %v1828
        %v1830 = vpop.f32.mrb[0].mxu0
        %1831 = vmatprep.mubr.f32.mxu0 0.0
        %1832 = vmatmul.mubr.f32.gmra.mrb[0].mxu0 %v1630
        %v1833 = vpop.f32.mrb[0].mxu0
        %v1834 = vadd.f32 %v1569, %v1833
        %v1835 = vpop.f32.mrb[0].mxu0
        %1836 = vmatprep.mubr.f32.mxu0 0.0
        %1837 = vmatmul.mubr.f32.gmra.mrb[0].mxu0 %v1633
        %v1838 = vpop.f32.mrb[0].mxu0
        %v1839 = vadd.f32 %v1569, %v1838
        %v1840 = vpop.f32.mrb[0].mxu0
        %1841 = vmatprep.mubr.f32.mxu0 0.0
        %1842 = vmatmul.mubr.f32.gmra.mrb[0].mxu0 %v1636
        %v1843 = vpop.f32.mrb[0].mxu0
        %v1844 = vadd.f32 %v1569, %v1843
        %v1845 = vpop.f32.mrb[0].mxu0
        %1846 = vmatprep.mubr.f32.mxu0 0.0
        %1847 = vmatmul.mubr.f32.gmra.mrb[0].mxu0 %v1639
        %v1848 = vpop.f32.mrb[0].mxu0
        %v1849 = vadd.f32 %v1569, %v1848
        %v1850 = vpop.f32.mrb[0].mxu0
        %1851 = vmatprep.mubr.f32.mxu0 0.0
        %1852 = vmatmul.mubr.f32.gmra.mrb[0].mxu0 %v1642
        %v1853 = vpop.f32.mrb[0].mxu0
        %v1854 = vadd.f32 %v1569, %v1853
        %v1855 = vpop.f32.mrb[0].mxu0
        %1856 = vmatprep.mubr.f32.mxu0 0.0
        %1857 = vmatmul.mubr.f32.gmra.mrb[0].mxu0 %v1645
        %v1858 = vpop.f32.mrb[0].mxu0
        %v1859 = vadd.f32 %v1569, %v1858
        %v1860 = vpop.f32.mrb[0].mxu0
        %1861 = vmatprep.mubr.f32.mxu0 0.0
        %1862 = vmatmul.mubr.f32.gmra.mrb[0].mxu0 %v1648
        %v1863 = vpop.f32.mrb[0].mxu0
        %v1864 = vadd.f32 %v1569, %v1863
        %v1865 = vpop.f32.mrb[0].mxu0
        %1866 = vmatprep.mubr.f32.mxu0 0.0
        %1867 = vmatmul.mubr.f32.gmra.mrb[0].mxu0 %v1651
        %v1868 = vpop.f32.mrb[0].mxu0
        %v1869 = vadd.f32 %v1569, %v1868
        %v1870 = vpop.f32.mrb[0].mxu0
        %1871 = vmatprep.mubr.f32.mxu0 0.0
        %1872 = vmatmul.mubr.f32.gmra.mrb[0].mxu0 %v1654
        %v1873 = vpop.f32.mrb[0].mxu0
        %v1874 = vadd.f32 %v1569, %v1873
        %v1875 = vpop.f32.mrb[0].mxu0
        %1876 = vmatprep.mubr.f32.mxu0 0.0
        %1877 = vmatmul.mubr.f32.gmra.mrb[0].mxu0 %v1657
        %v1878 = vpop.f32.mrb[0].mxu0
        %v1879 = vadd.f32 %v1569, %v1878
        %v1880 = vpop.f32.mrb[0].mxu0
        %1881 = vmatprep.mubr.f32.mxu0 0.0
        %1882 = vmatmul.mubr.f32.gmra.mrb[0].mxu0 %v1660
        %v1883 = vpop.f32.mrb[0].mxu0
        %v1884 = vadd.f32 %v1569, %v1883
        %v1885 = vpop.f32.mrb[0].mxu0
        %1886 = vmatprep.mubr.f32.mxu0 0.0
        %1887 = vmatmul.mubr.f32.gmra.mrb[0].mxu0 %v1663
        %v1888 = vpop.f32.mrb[0].mxu0
        %v1889 = vadd.f32 %v1569, %v1888
        %v1890 = vpop.f32.mrb[0].mxu0
        %1891 = vmatprep.mubr.f32.mxu0 0.0
        %1892 = vmatmul.mubr.f32.gmra.mrb[0].mxu0 %v1666
        %v1893 = vpop.f32.mrb[0].mxu0
        %v1894 = vadd.f32 %v1569, %v1893
        %v1895 = vpop.f32.mrb[0].mxu0
        %1896 = vdwg.mxu0
        %v1897 = vmax.f32 %v1739, 0.0
        %v1898 = vmax.f32 %v1744, 0.0
        %v1899 = vmax.f32 %v1749, 0.0
        %v1900 = vmax.f32 %v1754, 0.0
        %v1901 = vmax.f32 %v1759, 0.0
        %v1902 = vmax.f32 %v1764, 0.0
        %v1903 = vmax.f32 %v1769, 0.0
        %v1904 = vmax.f32 %v1774, 0.0
        %v1905 = vmax.f32 %v1779, 0.0
        %v1906 = vmax.f32 %v1784, 0.0
        %v1907 = vmax.f32 %v1789, 0.0
        %v1908 = vmax.f32 %v1794, 0.0
        %v1909 = vmax.f32 %v1799, 0.0
        %v1910 = vmax.f32 %v1804, 0.0
        %v1911 = vmax.f32 %v1809, 0.0
        %v1912 = vmax.f32 %v1814, 0.0
        %v1913 = vmax.f32 %v1819, 0.0
        %v1914 = vmax.f32 %v1824, 0.0
        %v1915 = vmax.f32 %v1829, 0.0
        %v1916 = vmax.f32 %v1834, 0.0
        %v1917 = vmax.f32 %v1839, 0.0
        %v1918 = vmax.f32 %v1844, 0.0
        %v1919 = vmax.f32 %v1849, 0.0
        %v1920 = vmax.f32 %v1854, 0.0
        %v1921 = vmax.f32 %v1859, 0.0
        %v1922 = vmax.f32 %v1864, 0.0
        %v1923 = vmax.f32 %v1869, 0.0
        %v1924 = vmax.f32 %v1874, 0.0
        %v1925 = vmax.f32 %v1879, 0.0
        %v1926 = vmax.f32 %v1884, 0.0
        %v1927 = vmax.f32 %v1889, 0.0
        %v1928 = vmax.f32 %v1894, 0.0
        %vm1929 = vcmask 523264
        %1930 = vst.msk [vmem:[%s220] sm:$0xff] %vm1929, %v1897
        %1931 = vst.msk [vmem:[%s220 + $0x8] sm:$0xff] %vm1929, %v1898
        %1932 = vst.msk [vmem:[%s220 + $0x10] sm:$0xff] %vm1929, %v1899
        %1933 = vst.msk [vmem:[%s220 + $0x18] sm:$0xff] %vm1929, %v1900
        %1934 = vst.msk [vmem:[%s220 + $0x20] sm:$0xff] %vm1929, %v1901
        %1935 = vst.msk [vmem:[%s220 + $0x28] sm:$0xff] %vm1929, %v1902
        %1936 = vst.msk [vmem:[%s220 + $0x30] sm:$0xff] %vm1929, %v1903
        %1937 = vst.msk [vmem:[%s220 + $0x38] sm:$0xff] %vm1929, %v1904
        %1938 = vst.msk [vmem:[%s220 + $0x40] sm:$0xff] %vm1929, %v1905
        %1939 = vst.msk [vmem:[%s220 + $0x48] sm:$0xff] %vm1929, %v1906
        %1940 = vst.msk [vmem:[%s220 + $0x50] sm:$0xff] %vm1929, %v1907
        %1941 = vst.msk [vmem:[%s220 + $0x58] sm:$0xff] %vm1929, %v1908
        %1942 = vst.msk [vmem:[%s220 + $0x60] sm:$0xff] %vm1929, %v1909
        %1943 = vst.msk [vmem:[%s220 + $0x68] sm:$0xff] %vm1929, %v1910
        %1944 = vst.msk [vmem:[%s220 + $0x70] sm:$0xff] %vm1929, %v1911
        %1945 = vst.msk [vmem:[%s220 + $0x78] sm:$0xff] %vm1929, %v1912
        %1946 = vst.msk [vmem:[%s220 + $0x80] sm:$0xff] %vm1929, %v1913
        %1947 = vst.msk [vmem:[%s220 + $0x88] sm:$0xff] %vm1929, %v1914
        %1948 = vst.msk [vmem:[%s220 + $0x90] sm:$0xff] %vm1929, %v1915
        %1949 = vst.msk [vmem:[%s220 + $0x98] sm:$0xff] %vm1929, %v1916
        %1950 = vst.msk [vmem:[%s220 + $0xa0] sm:$0xff] %vm1929, %v1917
        %1951 = vst.msk [vmem:[%s220 + $0xa8] sm:$0xff] %vm1929, %v1918
        %1952 = vst.msk [vmem:[%s220 + $0xb0] sm:$0xff] %vm1929, %v1919
        %1953 = vst.msk [vmem:[%s220 + $0xb8] sm:$0xff] %vm1929, %v1920
        %1954 = vst.msk [vmem:[%s220 + $0xc0] sm:$0xff] %vm1929, %v1921
        %1955 = vst.msk [vmem:[%s220 + $0xc8] sm:$0xff] %vm1929, %v1922
        %1956 = vst.msk [vmem:[%s220 + $0xd0] sm:$0xff] %vm1929, %v1923
        %1957 = vst.msk [vmem:[%s220 + $0xd8] sm:$0xff] %vm1929, %v1924
        %1958 = vst.msk [vmem:[%s220 + $0xe0] sm:$0xff] %vm1929, %v1925
        %1959 = vst.msk [vmem:[%s220 + $0xe8] sm:$0xff] %vm1929, %v1926
        %1960 = vst.msk [vmem:[%s220 + $0xf0] sm:$0xff] %vm1929, %v1927
        %1961 = vst.msk [vmem:[%s220 + $0xf8] sm:$0xff] %vm1929, %v1928
        %s1962 = sand.u32 %s128, 1
        %s1963 = scalar_lea.sflag [#allocation3], %s1962
        %s1964 = sand.u32 %s128, 1
        %s1965 = smul.addr %s1964, 256
        %s1966 = scalar_lea.vmem [#allocation2], %s1965
        // Predicated region
        $region33: #{tpu_custom_call.1} parent=31 // pred_check
          %p1967 = pneg %p138
        $region34: #{tpu_custom_call.1} parent=31 // pred_check_branch
          %1969 = sbr.rel (%p1967) target = $region36
        $region35: #{tpu_custom_call.1} parent=31 // pred_region
          %s1970 = smul.u32 16, %s23
          %s1972 = ssub.s32 4096, 4096
          %1973 = vsyncadd %s1963, %s1972
          %s1974 = smul.addr %s1970, 2
          %s1975 = sadd.s32 %s24, %s1974
          %s1976 = smul.addr %s22, 32
          %s1977 = sadd.s32 %s1975, %s1976
          %s1978 = smul.addr %s1977, 128
          %s1979 = scalar_lea.hbm %s3, %s1978
          %s1980 = sshll.u32 %s1966, 4
          %s1981 = int_to_ptr.vmem [resolvable:$true] %s1980
          %1986 = dma.vmem_to_hbm [thread:$0]  %s1981, 4096, %s1979, %s1963, 128, 128, 8
        $region36: #{tpu_custom_call.1} parent=31 // pred_fallthru
          _
      $region32: #{tpu_custom_call.1} parent=5 // pred_fallthru
        _
      %p1987 = scmp.le.s32.totalorder 2, %s12
      // Predicated region
      $region37: #{tpu_custom_call.1} parent=5 // pred_check
        %p1988 = pneg %p1987
      $region38: #{tpu_custom_call.1} parent=5 // pred_check_branch
        %1990 = sbr.rel (%p1988) target = $region40
      $region39: #{tpu_custom_call.1} parent=5 // pred_region
        %s1991 = ssub.s32 %s12, 2
        // Predicated region
        $region41: #{tpu_custom_call.1} parent=39 // pred_check
          %p1992 = pneg %p144
        $region42: #{tpu_custom_call.1} parent=39 // pred_check_branch
          %1994 = sbr.rel (%p1992) target = $region44
        $region43: #{tpu_custom_call.1} parent=39 // pred_region
          %s1995 = sand.u32 %s129, 1
          %s1996 = scalar_lea.sflag [#allocation3], %s1995
          %s1997 = sand.u32 %s129, 1
          %s1998 = smul.addr %s1997, 256
          %s1999 = scalar_lea.vmem [#allocation2], %s1998
          %2000 = dma.done %s1996, 4096
        $region44: #{tpu_custom_call.1} parent=39 // pred_fallthru
          _
      $region40: #{tpu_custom_call.1} parent=5 // pred_fallthru
        _
    $region6: #{tpu_custom_call.1} parent=1 // loop_footer
      %s16 = sadd.s32 1, %s12
    $region7: #{tpu_custom_call.1} parent=1 // loop_footer_branch
      %11 = sbr.rel target = $region3
    $region8: #{tpu_custom_call.1} parent=1 // loop_exit
      _
    %2001 = vsyncpa [#allocation3], 1
    %s2002 = scalar_lea.sflag [#allocation3], 1
    %2003 = vsyncpa %s2002, 1

</llo_original>
